<compile_context>
chip_gen: v7x
topology: tpu7x:2x2x1
jax: 0.10.0
libtpu: 0.0.40
codegen_flags: <defaults>
</compile_context>

<pallas_src>
import functools

import jax
import jax.numpy as jnp
from jax.experimental import pallas as pl
from jax.experimental.pallas import tpu as pltpu


def _round_up(a, b):
    return (a + b - 1) // b * b


def _pose_loss_kernel(verts_ref, off_ref, pts_ref, out_ref, *,
                      h_ratio, hscale, focal, cx, cy,
                      num_frames, num_verts, frames_per_tile, masked):
    """One (frames_per_tile, Vp) tile: transform, project, squared-error sum.

    verts_ref: (3, tF, Vp)  x/y/z coordinate planes
    off_ref:   (3, tF, 1)   per-frame offsets (broadcast over lanes)
    pts_ref:   (2, tF, Vp)  target u/v planes
    out_ref:   (1, 8, 128)  per-shard accumulator (all elements hold the sum)
    """
    t = pl.program_id(1)

    @pl.when(t == 0)
    def _init():
        out_ref[...] = jnp.zeros_like(out_ref)

    x = verts_ref[0]
    y = verts_ref[1]
    z = verts_ref[2]
    ox = off_ref[0]
    oy = off_ref[1]
    oz = off_ref[2]
    px = pts_ref[0]
    py = pts_ref[1]

    # verts * h_ratio + hscale * offset  (offset broadcasts along lanes)
    xt = x * h_ratio + hscale * ox
    yt = y * h_ratio + hscale * oy
    w = z * h_ratio + hscale * oz            # third row of K is [0, 0, 1]

    if masked:
        g = pl.program_id(0) * pl.num_programs(1) + t      # global frame tile
        row = jax.lax.broadcasted_iota(jnp.int32, x.shape, 0) + g * frames_per_tile
        lane = jax.lax.broadcasted_iota(jnp.int32, x.shape, 1)
        valid = (row < num_frames) & (lane < num_verts)
        w_div = jnp.where(valid, w, 1.0)      # keep padding away from 1/0
    else:
        w_div = w

    # bmm(verts, K^T) + perspective divide, written out elementwise.
    inv_w = pl.reciprocal(w_div, approx=False)   # EUP slot; exact for tolerance
    u = (focal * xt + cx * w) * inv_w
    v = (focal * yt + cy * w) * inv_w

    du = px - u
    dv = py - v
    if masked:
        du = jnp.where(valid, du, 0.0)
        dv = jnp.where(valid, dv, 0.0)

    # Unnormalized partial sum; normalize/count are applied once outside.
    out_ref[...] += jnp.sum(du * du + dv * dv)


def pose_optimizer_loss(smpl_verts, smpl_offset, points, *,
                        h_ratio, hscale, focal, img_w, img_h):
    """Computes loss_dict['l_points'] of PoseOptimizer.forward.

    smpl_verts:  (F, V, 3) float32
    smpl_offset: (F, 3)    float32 (the nn.Parameter)
    points:      (F, V, 2) float32 (batch['points'])
    Returns a scalar float32.
    """
    F, V, _ = smpl_verts.shape
    cx = img_w / 2.0
    cy = img_h / 2.0
    normalize = 1.0 / (0.5 * (img_h + img_w))
    count = float(F * V * 2)

    # ---- tiling ------------------------------------------------------------
    Vp = _round_up(V, 128)                       # lane-dense blocks
    if F <= 8:
        tF = F                                   # one full-extent frame tile
    else:
        # ~4 MiB of pipelined f32 input per grid step (5 planes, double
        # buffered) -> well under v5e's 16 MiB scoped default and v7x VMEM.
        tF = (4 * 1024 * 1024) // (5 * Vp * 4)
        tF = max(8, min(64, (tF // 8) * 8))
        tF = min(tF, _round_up(F, 8))
    Fp = _round_up(F, tF)
    n_tiles = Fp // tF
    n_shards = 2 if (n_tiles >= 2 and n_tiles % 2 == 0) else 1
    tiles_per_shard = n_tiles // n_shards
    masked = (Fp != F) or (Vp != V)

    # ---- layout glue: one transpose per array (no strided [..., i] slices) --
    verts_p = jnp.transpose(smpl_verts.astype(jnp.float32), (2, 0, 1))       # (3,F,V)
    pts_p = jnp.transpose(points.astype(jnp.float32), (2, 0, 1))             # (2,F,V)
    off_p = jnp.transpose(smpl_offset.astype(jnp.float32), (1, 0))[:, :, None]  # (3,F,1)

    if Fp != F or Vp != V:
        verts_p = jnp.pad(verts_p, ((0, 0), (0, Fp - F), (0, Vp - V)))
        pts_p = jnp.pad(pts_p, ((0, 0), (0, Fp - F), (0, Vp - V)))
    if Fp != F:
        off_p = jnp.pad(off_p, ((0, 0), (0, Fp - F), (0, 0)))

    kernel = functools.partial(
        _pose_loss_kernel,
        h_ratio=float(h_ratio), hscale=float(hscale), focal=float(focal),
        cx=float(cx), cy=float(cy),
        num_frames=F, num_verts=V, frames_per_tile=tF, masked=masked)

    frame_block = lambda s, t: (0, s * tiles_per_shard + t, 0)
    verts_spec = pl.BlockSpec((3, tF, Vp), frame_block)
    off_spec = pl.BlockSpec((3, tF, 1), frame_block)
    pts_spec = pl.BlockSpec((2, tF, Vp), frame_block)
    out_spec = pl.BlockSpec((1, 8, 128), lambda s, t: (s, 0, 0))

    partials = pl.pallas_call(
        kernel,
        out_shape=jax.ShapeDtypeStruct((n_shards, 8, 128), jnp.float32),
        grid=(n_shards, tiles_per_shard),
        in_specs=[verts_spec, off_spec, pts_spec],
        out_specs=out_spec,
        compiler_params=pltpu.CompilerParams(
            dimension_semantics=("parallel", "arbitrary"),
            vmem_limit_bytes=32 * 1024 * 1024),
    )(verts_p, off_p, pts_p)

    # Each shard's accumulator block is constant-filled; take one element per
    # shard, sum over shards, apply normalize + mean once.
    return jnp.sum(partials[:, 0, 0]) * jnp.float32(normalize / count)


def _reference_loss(smpl_verts, smpl_offset, points,
                    *, h_ratio, hscale, focal, img_w, img_h):
    # Pure-JAX re-implementation of the PyTorch forward (for verification).
    F, V, _ = smpl_verts.shape
    verts = smpl_verts * h_ratio
    off = jnp.broadcast_to(smpl_offset[:, None, :], (F, V, 3))
    verts = verts + hscale * off
    K = jnp.array([[focal, 0.0, img_w / 2.0],
                   [0.0, focal, img_h / 2.0],
                   [0.0, 0.0, 1.0]], dtype=jnp.float32)
    pts = jnp.einsum('fvc,dc->fvd', verts, K)
    smpl_2d = pts[..., :2] / pts[..., 2:]
    normalize = 1.0 / (0.5 * (img_h + img_w))
    return jnp.mean(normalize * (points - smpl_2d) ** 2)


if __name__ == "__main__":
    # Deterministic synthetic config (module __init__):
    num_frames = 250        # F (pads to 256 -> 4 frame tiles, 2 parallel shards)
    num_verts = 300         # V (small stand-in for SMPL's 6890; pads to 384 lanes)
    hscale = 1.0            # `scale`
    focal_length = 500.0
    img_w = 256
    img_h = 256
    # h_ratio = human_height / height-of-calibration-mesh; synthetic mesh of height 1.0
    h_ratio = 1.75 / 1.0

    key = jax.random.PRNGKey(0)
    k1, k2 = jax.random.split(key)
    smpl_verts = jax.random.normal(k1, (num_frames, num_verts, 3),
                                   dtype=jnp.float32) * 0.3
    # nn.Parameter init: offsets (0, 0, 2.5) per frame
    smpl_offset = jnp.tile(jnp.array([[0.0, 0.0, 2.5]], dtype=jnp.float32),
                           (num_frames, 1))
    # batch['points']: 2D target points, same shape as smpl_2d
    points = jax.random.normal(k2, (num_frames, num_verts, 2),
                               dtype=jnp.float32) * 10.0 + 128.0

    loss = pose_optimizer_loss(smpl_verts, smpl_offset, points,
                               h_ratio=h_ratio, hscale=hscale,
                               focal=focal_length, img_w=img_w, img_h=img_h)
    loss = jax.block_until_ready(loss)

    ref = _reference_loss(smpl_verts, smpl_offset, points,
                          h_ratio=h_ratio, hscale=hscale,
                          focal=focal_length, img_w=img_w, img_h=img_h)
    ref = jax.block_until_ready(ref)

    # rtol accounts for f32 summation-order differences over ~150k terms.
    assert jnp.allclose(loss, ref, rtol=1e-4, atol=1e-4), (loss, ref)
    print("KERNEL_OK")
</pallas_src>

<mosaic_0001>
module attributes {stable_mosaic.version = 11 : i64} {
  func.func @_pose_loss_kernel(%arg0: i32, %arg1: i32, %arg2: memref<3x64x384xf32, #tpu.memory_space<vmem>>, %arg3: memref<3x64x1xf32, #tpu.memory_space<vmem>>, %arg4: memref<2x64x384xf32, #tpu.memory_space<vmem>>, %arg5: memref<1x8x128xf32, #tpu.memory_space<vmem>>) attributes {dimension_semantics = [#tpu.dimension_semantics<parallel>, #tpu.dimension_semantics<arbitrary>], iteration_bounds = array<i64: 2, 2>, scalar_prefetch = 0 : i64, scratch_operands = 0 : i64, tpu.core_type = #tpu.core_type<tc>, window_params = [{transform_indices = @transform_0, window_bounds = array<i64: 3, 64, 384>}, {transform_indices = @transform_1, window_bounds = array<i64: 3, 64, 1>}, {transform_indices = @transform_2, window_bounds = array<i64: 2, 64, 384>}, {transform_indices = @transform_3, window_bounds = array<i64: 1, 8, 128>}]} {
    %c0_i32 = arith.constant 0 : i32
    %0 = arith.cmpi eq, %arg1, %c0_i32 : i32
    %1 = arith.extui %0 : i1 to i32
    %c0_i32_0 = arith.constant 0 : i32
    %2 = arith.cmpi ne, %1, %c0_i32_0 : i32
    scf.if %2 {
      %cst_41 = arith.constant 0.000000e+00 : f32
      %81 = vector.broadcast %cst_41 : f32 to vector<1x8x128xf32>
      %c0_42 = arith.constant 0 : index
      %c0_43 = arith.constant 0 : index
      %c0_44 = arith.constant 0 : index
      %82 = vector.load %arg5[%c0_42, %c0_43, %c0_44] : memref<1x8x128xf32, #tpu.memory_space<vmem>>, vector<1x8x128xf32>
      tpu.vector_store %arg5[%c0_42, %c0_43, %c0_44], %81 {strides = array<i32>} : memref<1x8x128xf32, #tpu.memory_space<vmem>>, vector<1x8x128xf32>,
    } else {
    }
    %c0 = arith.constant 0 : index
    %c0_1 = arith.constant 0 : index
    %c0_2 = arith.constant 0 : index
    %3 = vector.load %arg2[%c0, %c0_1, %c0_2] : memref<3x64x384xf32, #tpu.memory_space<vmem>>, vector<1x64x384xf32>
    %4 = vector.shape_cast %3 : vector<1x64x384xf32> to vector<64x384xf32>
    %c1 = arith.constant 1 : index
    %c0_3 = arith.constant 0 : index
    %c0_4 = arith.constant 0 : index
    %5 = vector.load %arg2[%c1, %c0_3, %c0_4] : memref<3x64x384xf32, #tpu.memory_space<vmem>>, vector<1x64x384xf32>
    %6 = vector.shape_cast %5 : vector<1x64x384xf32> to vector<64x384xf32>
    %c2 = arith.constant 2 : index
    %c0_5 = arith.constant 0 : index
    %c0_6 = arith.constant 0 : index
    %7 = vector.load %arg2[%c2, %c0_5, %c0_6] : memref<3x64x384xf32, #tpu.memory_space<vmem>>, vector<1x64x384xf32>
    %8 = vector.shape_cast %7 : vector<1x64x384xf32> to vector<64x384xf32>
    %c0_7 = arith.constant 0 : index
    %c0_8 = arith.constant 0 : index
    %c0_9 = arith.constant 0 : index
    %9 = vector.load %arg3[%c0_7, %c0_8, %c0_9] : memref<3x64x1xf32, #tpu.memory_space<vmem>>, vector<1x64x1xf32>
    %10 = vector.shape_cast %9 : vector<1x64x1xf32> to vector<64x1xf32>
    %c1_10 = arith.constant 1 : index
    %c0_11 = arith.constant 0 : index
    %c0_12 = arith.constant 0 : index
    %11 = vector.load %arg3[%c1_10, %c0_11, %c0_12] : memref<3x64x1xf32, #tpu.memory_space<vmem>>, vector<1x64x1xf32>
    %12 = vector.shape_cast %11 : vector<1x64x1xf32> to vector<64x1xf32>
    %c2_13 = arith.constant 2 : index
    %c0_14 = arith.constant 0 : index
    %c0_15 = arith.constant 0 : index
    %13 = vector.load %arg3[%c2_13, %c0_14, %c0_15] : memref<3x64x1xf32, #tpu.memory_space<vmem>>, vector<1x64x1xf32>
    %14 = vector.shape_cast %13 : vector<1x64x1xf32> to vector<64x1xf32>
    %c0_16 = arith.constant 0 : index
    %c0_17 = arith.constant 0 : index
    %c0_18 = arith.constant 0 : index
    %15 = vector.load %arg4[%c0_16, %c0_17, %c0_18] : memref<2x64x384xf32, #tpu.memory_space<vmem>>, vector<1x64x384xf32>
    %16 = vector.shape_cast %15 : vector<1x64x384xf32> to vector<64x384xf32>
    %c1_19 = arith.constant 1 : index
    %c0_20 = arith.constant 0 : index
    %c0_21 = arith.constant 0 : index
    %17 = vector.load %arg4[%c1_19, %c0_20, %c0_21] : memref<2x64x384xf32, #tpu.memory_space<vmem>>, vector<1x64x384xf32>
    %18 = vector.shape_cast %17 : vector<1x64x384xf32> to vector<64x384xf32>
    %cst = arith.constant 1.750000e+00 : f32
    %19 = vector.broadcast %cst : f32 to vector<64x384xf32>
    %20 = arith.mulf %4, %19 : vector<64x384xf32>
    %cst_22 = arith.constant 1.000000e+00 : f32
    %21 = vector.broadcast %cst_22 : f32 to vector<64x1xf32>
    %22 = arith.mulf %21, %10 : vector<64x1xf32>
    %23 = vector.broadcast %22 : vector<64x1xf32> to vector<64x384xf32>
    %24 = arith.addf %20, %23 : vector<64x384xf32>
    %cst_23 = arith.constant 1.750000e+00 : f32
    %25 = vector.broadcast %cst_23 : f32 to vector<64x384xf32>
    %26 = arith.mulf %6, %25 : vector<64x384xf32>
    %cst_24 = arith.constant 1.000000e+00 : f32
    %27 = vector.broadcast %cst_24 : f32 to vector<64x1xf32>
    %28 = arith.mulf %27, %12 : vector<64x1xf32>
    %29 = vector.broadcast %28 : vector<64x1xf32> to vector<64x384xf32>
    %30 = arith.addf %26, %29 : vector<64x384xf32>
    %cst_25 = arith.constant 1.750000e+00 : f32
    %31 = vector.broadcast %cst_25 : f32 to vector<64x384xf32>
    %32 = arith.mulf %8, %31 : vector<64x384xf32>
    %cst_26 = arith.constant 1.000000e+00 : f32
    %33 = vector.broadcast %cst_26 : f32 to vector<64x1xf32>
    %34 = arith.mulf %33, %14 : vector<64x1xf32>
    %35 = vector.broadcast %34 : vector<64x1xf32> to vector<64x384xf32>
    %36 = arith.addf %32, %35 : vector<64x384xf32>
    %c2_i32 = arith.constant 2 : i32
    %37 = arith.muli %arg0, %c2_i32 : i32
    %38 = arith.addi %37, %arg1 : i32
    %39 = tpu.iota {dimensions = array<i32: 0>} : vector<64x384xi32>
    %c64_i32 = arith.constant 64 : i32
    %40 = arith.muli %38, %c64_i32 : i32
    %41 = vector.broadcast %40 : i32 to vector<64x384xi32>
    %42 = arith.addi %39, %41 : vector<64x384xi32>
    %43 = tpu.iota {dimensions = array<i32: 1>} : vector<64x384xi32>
    %c250_i32 = arith.constant 250 : i32
    %44 = vector.broadcast %c250_i32 : i32 to vector<64x384xi32>
    %45 = arith.cmpi slt, %42, %44 : vector<64x384xi32>
    %c300_i32 = arith.constant 300 : i32
    %46 = vector.broadcast %c300_i32 : i32 to vector<64x384xi32>
    %47 = arith.cmpi slt, %43, %46 : vector<64x384xi32>
    %48 = arith.andi %45, %47 : vector<64x384xi1>
    %cst_27 = arith.constant 1.000000e+00 : f32
    %49 = vector.broadcast %cst_27 : f32 to vector<64x384xf32>
    %50 = arith.select %48, %36, %49 : vector<64x384xi1>, vector<64x384xf32>
    %51 = tpu.reciprocal %50 : vector<64x384xf32> -> vector<64x384xf32>
    %cst_28 = arith.constant 5.000000e+02 : f32
    %52 = vector.broadcast %cst_28 : f32 to vector<64x384xf32>
    %53 = arith.mulf %52, %24 : vector<64x384xf32>
    %cst_29 = arith.constant 1.280000e+02 : f32
    %54 = vector.broadcast %cst_29 : f32 to vector<64x384xf32>
    %55 = arith.mulf %54, %36 : vector<64x384xf32>
    %56 = arith.addf %53, %55 : vector<64x384xf32>
    %57 = arith.mulf %56, %51 : vector<64x384xf32>
    %cst_30 = arith.constant 5.000000e+02 : f32
    %58 = vector.broadcast %cst_30 : f32 to vector<64x384xf32>
    %59 = arith.mulf %58, %30 : vector<64x384xf32>
    %cst_31 = arith.constant 1.280000e+02 : f32
    %60 = vector.broadcast %cst_31 : f32 to vector<64x384xf32>
    %61 = arith.mulf %60, %36 : vector<64x384xf32>
    %62 = arith.addf %59, %61 : vector<64x384xf32>
    %63 = arith.mulf %62, %51 : vector<64x384xf32>
    %64 = arith.subf %16, %57 : vector<64x384xf32>
    %65 = arith.subf %18, %63 : vector<64x384xf32>
    %cst_32 = arith.constant 0.000000e+00 : f32
    %66 = vector.broadcast %cst_32 : f32 to vector<64x384xf32>
    %67 = arith.select %48, %64, %66 : vector<64x384xi1>, vector<64x384xf32>
    %cst_33 = arith.constant 0.000000e+00 : f32
    %68 = vector.broadcast %cst_33 : f32 to vector<64x384xf32>
    %69 = arith.select %48, %65, %68 : vector<64x384xi1>, vector<64x384xf32>
    %c0_34 = arith.constant 0 : index
    %c0_35 = arith.constant 0 : index
    %c0_36 = arith.constant 0 : index
    %70 = vector.load %arg5[%c0_34, %c0_35, %c0_36] : memref<1x8x128xf32, #tpu.memory_space<vmem>>, vector<1x8x128xf32>
    %71 = arith.mulf %67, %67 : vector<64x384xf32>
    %72 = arith.mulf %69, %69 : vector<64x384xf32>
    %73 = arith.addf %71, %72 : vector<64x384xf32>
    %74 = vector.shape_cast %73 : vector<64x384xf32> to vector<1x64x384xf32>
    %cst_37 = arith.constant dense<0.000000e+00> : vector<1xf32>
    %75 = vector.multi_reduction <add>, %74, %cst_37 [1, 2] : vector<1x64x384xf32> to vector<1xf32>
    %76 = vector.shape_cast %75 : vector<1xf32> to vector<1x1x1xf32>
    %77 = vector.extract %76[0, 0, 0] : f32 from vector<1x1x1xf32>
    %78 = vector.broadcast %77 : f32 to vector<1x8x128xf32>
    %79 = arith.addf %70, %78 : vector<1x8x128xf32>
    %c0_38 = arith.constant 0 : index
    %c0_39 = arith.constant 0 : index
    %c0_40 = arith.constant 0 : index
    %80 = vector.load %arg5[%c0_38, %c0_39, %c0_40] : memref<1x8x128xf32, #tpu.memory_space<vmem>>, vector<1x8x128xf32>
    tpu.vector_store %arg5[%c0_38, %c0_39, %c0_40], %79 {strides = array<i32>} : memref<1x8x128xf32, #tpu.memory_space<vmem>>, vector<1x8x128xf32>,
    return
  }
  func.func @transform_0(%arg0: i32, %arg1: i32) -> (i32, i32, i32) {
    %c2_i32 = arith.constant 2 : i32
    %0 = arith.muli %arg0, %c2_i32 : i32
    %1 = arith.addi %0, %arg1 : i32
    %c0_i32 = arith.constant 0 : i32
    %c0_i32_0 = arith.constant 0 : i32
    %c0_i32_1 = arith.constant 0 : i32
    return %c0_i32, %1, %c0_i32_0 : i32, i32, i32
  }
  func.func @transform_1(%arg0: i32, %arg1: i32) -> (i32, i32, i32) {
    %c2_i32 = arith.constant 2 : i32
    %0 = arith.muli %arg0, %c2_i32 : i32
    %1 = arith.addi %0, %arg1 : i32
    %c0_i32 = arith.constant 0 : i32
    %c0_i32_0 = arith.constant 0 : i32
    %c0_i32_1 = arith.constant 0 : i32
    return %c0_i32, %1, %c0_i32_0 : i32, i32, i32
  }
  func.func @transform_2(%arg0: i32, %arg1: i32) -> (i32, i32, i32) {
    %c2_i32 = arith.constant 2 : i32
    %0 = arith.muli %arg0, %c2_i32 : i32
    %1 = arith.addi %0, %arg1 : i32
    %c0_i32 = arith.constant 0 : i32
    %c0_i32_0 = arith.constant 0 : i32
    %c0_i32_1 = arith.constant 0 : i32
    return %c0_i32, %1, %c0_i32_0 : i32, i32, i32
  }
  func.func @transform_3(%arg0: i32, %arg1: i32) -> (i32, i32, i32) {
    %c0_i32 = arith.constant 0 : i32
    %c0_i32_0 = arith.constant 0 : i32
    %c0_i32_1 = arith.constant 0 : i32
    return %arg0, %c0_i32, %c0_i32_0 : i32, i32, i32
  }
}

</mosaic_0001>

<llo_original>
// kernel: tpu_custom_call.1
$region0: #{tpu_custom_call.1}
  #allocation0 [shape = 'u32[]', space=smem, size = 0x4, offset = 0x4, fixed_abs, tag = 'smem constant byte address 0x4 - core index']
  #allocation1 [shape = 'u32[144,128]{1,0:T(1,128)}', space=vmem, size = 0x12000, scoped, tag = 'internal scratch']
  #allocation9 [shape = 's32[]', space=sflag, size = 0x4, offset = 0, fixed_abs, tag = 'sflag constant byte address 0x0 - dummy sync flag']
  #allocation11 [shape = 's32[]', space=sflag, size = 0x4, offset = 0, fixed_abs, tag = 'sflag constant byte address 0x0 - dummy sync flag']
  %s0 = inlined_call_operand.hbm [shape: f32[3,256,384], index: 0, kind: input, shape index: {}]
  %s1 = inlined_call_operand.vmem [shape: f32[3,256,1], index: 1, kind: input, shape index: {}]
  %s2 = inlined_call_operand.hbm [shape: f32[2,256,384], index: 2, kind: input, shape index: {}]
  %s3 = inlined_call_operand.hbm [shape: f32[2,8,128], index: 3, kind: output, shape index: {}]
  %s4 = sld [smem:[#allocation0]]
  $region95: #{tpu_custom_call.1} parent=0
    _
  %s6 = ssub.s32 1, %s4
  %s7 = scalar_select 0, %s6, %s4
  $region1: #{tpu_custom_call.1} parent=0
    #allocation2 [shape = 'u8[589824]{0}', space=vmem, size = 0x90000, scoped, tag = 'input window, operand 0']
    #allocation3 [shape = 's32[2]{0}', space=sflag, size = 0x8, scoped, tag = 'scoped memory for tpu_custom_call.1']
    #allocation4 [shape = 's32[2]{0}', space=sflag, size = 0x8, scoped, tag = 'scoped memory for tpu_custom_call.1']
    #allocation5 [shape = 'u8[196608]{0}', space=vmem, size = 0x30000, scoped, tag = 'input window, operand 1']
    #allocation6 [shape = 'u8[393216]{0}', space=vmem, size = 0x60000, scoped, tag = 'input window, operand 2']
    #allocation7 [shape = 's32[2]{0}', space=sflag, size = 0x8, scoped, tag = 'scoped memory for tpu_custom_call.1']
    #allocation8 [shape = 'u8[8192]{0}', space=vmem, size = 0x2000, scoped, tag = 'output window, operand 0']
    %8 = vsyncpa [#allocation3], 0
    %s9 = scalar_lea.sflag [#allocation3], 1
    %10 = vsyncpa %s9, 0
    %11 = vsyncpa [#allocation7], 0
    %s12 = scalar_lea.sflag [#allocation7], 1
    %13 = vsyncpa %s12, 0
    %14 = vsyncpa [#allocation4], 0
    %s15 = scalar_lea.sflag [#allocation4], 1
    %16 = vsyncpa %s15, 0
    loop: start=0, step=1, limit=6
    $region2: #{tpu_custom_call.1} parent=1 // loop_pre_header
      _
    $region3: #{tpu_custom_call.1} parent=1 // loop_header
      %s18 = sphi 0, %s22
      %p19 = scmp.ge.s32.totalorder %s18, 6
      %s25 = sphi 0, %s37
      %s26 = sphi 0, %s33
      %s27 = sphi 0, %s25
      %s28 = sphi 0, %s26
      %s29 = sphi 0, %s27
      %s30 = sphi 0, %s28
      %s44 = sphi 0, %s46
      %s47 = sphi 0, %s44
      %s48 = sphi 0, %s47
      %s64 = sphi 0, %s48
      %s74 = sphi 0, %s76
      %s77 = sphi 0, %s74
      %s78 = sphi 0, %s77
      %s94 = sphi 0, %s78
      %s104 = sphi 0, %s106
      %s107 = sphi 0, %s104
      %s108 = sphi 0, %s107
      %s124 = sphi 0, %s108
      %s130 = sphi 0, %s132
      %s133 = sphi 0, %s130
      %s134 = sphi 0, %s133
      %s150 = sphi 0, %s134
    $region4: #{tpu_custom_call.1} parent=1 // loop_header_branch
      %21 = sbr.rel (%p19) target = $region8
    $region5: #{tpu_custom_call.1} parent=1 // loop_body
      %s23 = ssub.s32 %s18, 1
      %s24 = ssub.s32 %s18, 2
      %s31 = sadd.s32 1, %s26
      %p32 = scmp.ge.s32.totalorder %s31, 2
      %s33 = scalar_select %p32, 0, %s31
      %s34 = sadd.s32 1, %s25
      %s35 = scalar_select %p32, %s34, %s25
      %p36 = scmp.ge.s32.totalorder %s35, 2
      %s37 = scalar_select %p36, 0, %s35
      %s38 = smul.u32 %s25, 2
      %s39 = sadd.s32 %s38, %s26
      %s40 = smul.u32 %s37, 2
      %s41 = sadd.s32 %s40, %s33
      %s42 = ssub.s32 %s39, %s41
      %p43 = scmp.eq.s32.totalorder %s42, 0
      %s45 = sadd.s32 %s44, 1
      %s46 = scalar_select %p43, %s44, %s45
      %p49 = pneg %p43
      %p50 = scmp.eq.s32.totalorder %s18, 3
      %p51 = por %p49, %p50
      %p52 = scmp.ne.s32.totalorder %s44, %s47
      %p53 = scmp.eq.s32.totalorder %s18, 0
      %p54 = por %p52, %p53
      %p55 = scmp.ne.s32.totalorder %s44, %s47
      %p56 = scmp.eq.s32.totalorder %s23, 3
      %p57 = por %p55, %p56
      %p58 = scmp.ne.s32.totalorder %s47, %s48
      %p59 = scmp.eq.s32.totalorder %s23, 0
      %p60 = por %p58, %p59
      %p61 = scmp.ne.s32.totalorder %s47, %s48
      %p62 = scmp.eq.s32.totalorder %s24, 3
      %p63 = por %p61, %p62
      %p65 = scmp.ne.s32.totalorder %s48, %s64
      %p66 = scmp.eq.s32.totalorder %s24, 0
      %p67 = por %p65, %p66
      %s68 = smul.u32 %s25, 2
      %s69 = sadd.s32 %s68, %s26
      %s70 = smul.u32 %s37, 2
      %s71 = sadd.s32 %s70, %s33
      %s72 = ssub.s32 %s69, %s71
      %p73 = scmp.eq.s32.totalorder %s72, 0
      %s75 = sadd.s32 %s74, 1
      %s76 = scalar_select %p73, %s74, %s75
      %p79 = pneg %p73
      %p80 = scmp.eq.s32.totalorder %s18, 3
      %p81 = por %p79, %p80
      %p82 = scmp.ne.s32.totalorder %s74, %s77
      %p83 = scmp.eq.s32.totalorder %s18, 0
      %p84 = por %p82, %p83
      %p85 = scmp.ne.s32.totalorder %s74, %s77
      %p86 = scmp.eq.s32.totalorder %s23, 3
      %p87 = por %p85, %p86
      %p88 = scmp.ne.s32.totalorder %s77, %s78
      %p89 = scmp.eq.s32.totalorder %s23, 0
      %p90 = por %p88, %p89
      %p91 = scmp.ne.s32.totalorder %s77, %s78
      %p92 = scmp.eq.s32.totalorder %s24, 3
      %p93 = por %p91, %p92
      %p95 = scmp.ne.s32.totalorder %s78, %s94
      %p96 = scmp.eq.s32.totalorder %s24, 0
      %p97 = por %p95, %p96
      %s98 = smul.u32 %s25, 2
      %s99 = sadd.s32 %s98, %s26
      %s100 = smul.u32 %s37, 2
      %s101 = sadd.s32 %s100, %s33
      %s102 = ssub.s32 %s99, %s101
      %p103 = scmp.eq.s32.totalorder %s102, 0
      %s105 = sadd.s32 %s104, 1
      %s106 = scalar_select %p103, %s104, %s105
      %p109 = pneg %p103
      %p110 = scmp.eq.s32.totalorder %s18, 3
      %p111 = por %p109, %p110
      %p112 = scmp.ne.s32.totalorder %s104, %s107
      %p113 = scmp.eq.s32.totalorder %s18, 0
      %p114 = por %p112, %p113
      %p115 = scmp.ne.s32.totalorder %s104, %s107
      %p116 = scmp.eq.s32.totalorder %s23, 3
      %p117 = por %p115, %p116
      %p118 = scmp.ne.s32.totalorder %s107, %s108
      %p119 = scmp.eq.s32.totalorder %s23, 0
      %p120 = por %p118, %p119
      %p121 = scmp.ne.s32.totalorder %s107, %s108
      %p122 = scmp.eq.s32.totalorder %s24, 3
      %p123 = por %p121, %p122
      %p125 = scmp.ne.s32.totalorder %s108, %s124
      %p126 = scmp.eq.s32.totalorder %s24, 0
      %p127 = por %p125, %p126
      %s128 = ssub.s32 %s25, %s37
      %p129 = scmp.eq.s32.totalorder %s128, 0
      %s131 = sadd.s32 %s130, 1
      %s132 = scalar_select %p129, %s130, %s131
      %p135 = pneg %p129
      %p136 = scmp.eq.s32.totalorder %s18, 3
      %p137 = por %p135, %p136
      %p138 = scmp.ne.s32.totalorder %s130, %s133
      %p139 = scmp.eq.s32.totalorder %s18, 0
      %p140 = por %p138, %p139
      %p141 = scmp.ne.s32.totalorder %s130, %s133
      %p142 = scmp.eq.s32.totalorder %s23, 3
      %p143 = por %p141, %p142
      %p144 = scmp.ne.s32.totalorder %s133, %s134
      %p145 = scmp.eq.s32.totalorder %s23, 0
      %p146 = por %p144, %p145
      %p147 = scmp.ne.s32.totalorder %s133, %s134
      %p148 = scmp.eq.s32.totalorder %s24, 3
      %p149 = por %p147, %p148
      %p151 = scmp.ne.s32.totalorder %s134, %s150
      %p152 = scmp.eq.s32.totalorder %s24, 0
      %p153 = por %p151, %p152
      %p154 = scmp.le.s32.totalorder 1, %s18
      %p155 = scmp.lt.s32.totalorder %s18, 5
      %p156 = pnand %p154, %p155
      %p157 = pneg %p156
      // Predicated region
      $region9: #{tpu_custom_call.1} parent=5 // pred_check
        _
      $region10: #{tpu_custom_call.1} parent=5 // pred_check_branch
        %159 = sbr.rel (%p156) target = $region12
      $region11: #{tpu_custom_call.1} parent=5 // pred_region
        %s160 = ssub.s32 %s18, 1
      $region12: #{tpu_custom_call.1} parent=5 // pred_fallthru
        _
      %p161 = scmp.lt.s32.totalorder %s18, 4
      // Predicated region
      $region13: #{tpu_custom_call.1} parent=5 // pred_check
        %p162 = pneg %p161
      $region14: #{tpu_custom_call.1} parent=5 // pred_check_branch
        %164 = sbr.rel (%p162) target = $region16
      $region15: #{tpu_custom_call.1} parent=5 // pred_region
        // Predicated region
        $region17: #{tpu_custom_call.1} parent=15 // pred_check
          %p165 = pneg %p54
        $region18: #{tpu_custom_call.1} parent=15 // pred_check_branch
          %167 = sbr.rel (%p165) target = $region20
        $region19: #{tpu_custom_call.1} parent=15 // pred_region
          #allocation10 [shape = 'u32[6]{0}', space=smem, size = 0x18, scoped, tag = 'DMA stride descriptor']
          %s168 = sand.u32 %s44, 1
          %s169 = scalar_lea.sflag [#allocation3], %s168
          %s170 = sand.u32 %s44, 1
          %s171 = smul.addr %s170, 576
          %s172 = scalar_lea.vmem [#allocation2], %s171
          %s173 = smul.u32 %s25, 2
          %s174 = sadd.s32 %s173, %s26
          %s175 = smul.u32 8, %s174
          %s177 = ssub.s32 9216, 9216
          %178 = vsyncadd %s169, %s177
          %s179 = smul.addr %s175, 3
          %s180 = smul.addr %s179, 128
          %s181 = scalar_lea.hbm %s0, %s180
          %s183 = sshll.u32 1, 14
          %s184 = sxor.u32 4294967295, %s183
          %s186 = sld [smem:[#allocation0]]
          %s187 = sadd.s32 2, %s186
          %s189 = sshll.u32 7, 26
          %s190 = sxor.u32 4294967295, %s189
          %s191 = sand.u32 0, %s190
          %s192 = sshll.u32 %s187, 26
          %s193 = sor.u32 %s191, %s192
          %s194 = sshll.u32 %s172, 4
          %s195 = int_to_ptr.vmem [resolvable:$true] %s194
          %201 = sst [smem:[#allocation10]] 12288
          %s202 = scalar_lea.smem [#allocation10], 1
          %203 = sst [smem:[%s202]] 3072
          %s204 = scalar_lea.smem [#allocation10], 2
          %205 = sst [smem:[%s204]] 8
          %s206 = scalar_lea.smem [#allocation10], 3
          %207 = sst [smem:[%s206]] 384
          %s208 = scalar_lea.smem [#allocation10], 4
          %209 = sst [smem:[%s208]] 384
          %s210 = scalar_lea.smem [#allocation10], 5
          %211 = sst [smem:[%s210]] 24
          %213 = dma.general %s181, 9216, %s195, %s169, [#allocation9], [#allocation10], %s193, 0
        $region20: #{tpu_custom_call.1} parent=15 // pred_fallthru
          _
        // Predicated region
        $region21: #{tpu_custom_call.1} parent=15 // pred_check
          %p214 = pneg %p84
        $region22: #{tpu_custom_call.1} parent=15 // pred_check_branch
          %216 = sbr.rel (%p214) target = $region24
        $region23: #{tpu_custom_call.1} parent=15 // pred_region
          %s217 = sand.u32 %s74, 1
          %s218 = sand.u32 %s74, 1
          %s219 = smul.addr %s218, 192
          %s220 = scalar_lea.vmem [#allocation5], %s219
          %s221 = smul.u32 %s25, 2
          %s222 = sadd.s32 %s221, %s26
          %s223 = smul.u32 8, %s222
          %s224 = smul.addr %s223, 8
          %s225 = scalar_lea.vmem %s1, %s224
          // Predicated region
          $region25: #{tpu_custom_call.1} parent=23 // pred_check
            _
          $region26: #{tpu_custom_call.1} parent=23 // pred_check_branch
            %227 = sbr.rel (0) target = $region28
          $region27: #{tpu_custom_call.1} parent=23 // pred_region
            // Predicated region
            $region29: #{tpu_custom_call.1} parent=27 // pred_check
              _
            $region30: #{tpu_custom_call.1} parent=27 // pred_check_branch
              %229 = sbr.rel (0) target = $region32
            $region31: #{tpu_custom_call.1} parent=27 // pred_region
              // Predicated region
              $region44: #{tpu_custom_call.1} parent=31 // pred_check
                _
              $region45: #{tpu_custom_call.1} parent=31 // pred_check_branch
                %290 = sbr.rel (0) target = $region47
              $region46: #{tpu_custom_call.1} parent=31 // pred_region
                loop: start=0, step=1, limit=1
                $region48: #{tpu_custom_call.1} parent=46 // loop_pre_header
                  _
                $region49: #{tpu_custom_call.1} parent=46 // loop_header
                  %s292 = sphi 0, %s296
                  %p293 = scmp.ge.s32.totalorder %s292, 1
                  %s297 = sphi %s225, %s225
                  %s298 = sphi %s220, %s220
                $region50: #{tpu_custom_call.1} parent=46 // loop_header_branch
                  %295 = sbr.rel (%p293) target = $region54
                $region51: #{tpu_custom_call.1} parent=46 // loop_body
                  %v299 = vld [vmem:[%s297] sm:$0xff]
                  %300 = vst [vmem:[%s298] sm:$0xff] %v299
                  %v301 = vld [vmem:[%s297 + $0x8] sm:$0xff]
                  %302 = vst [vmem:[%s298 + $0x8] sm:$0xff] %v301
                  %v303 = vld [vmem:[%s297 + $0x10] sm:$0xff]
                  %304 = vst [vmem:[%s298 + $0x10] sm:$0xff] %v303
                  %v305 = vld [vmem:[%s297 + $0x18] sm:$0xff]
                  %306 = vst [vmem:[%s298 + $0x18] sm:$0xff] %v305
                  %v307 = vld [vmem:[%s297 + $0x20] sm:$0xff]
                  %308 = vst [vmem:[%s298 + $0x20] sm:$0xff] %v307
                  %v309 = vld [vmem:[%s297 + $0x28] sm:$0xff]
                  %310 = vst [vmem:[%s298 + $0x28] sm:$0xff] %v309
                  %v311 = vld [vmem:[%s297 + $0x30] sm:$0xff]
                  %312 = vst [vmem:[%s298 + $0x30] sm:$0xff] %v311
                  %v313 = vld [vmem:[%s297 + $0x38] sm:$0xff]
                  %314 = vst [vmem:[%s298 + $0x38] sm:$0xff] %v313
                  %v315 = vld [vmem:[%s297 + $0x100] sm:$0xff]
                  %316 = vst [vmem:[%s298 + $0x40] sm:$0xff] %v315
                  %v317 = vld [vmem:[%s297 + $0x108] sm:$0xff]
                  %318 = vst [vmem:[%s298 + $0x48] sm:$0xff] %v317
                  %v319 = vld [vmem:[%s297 + $0x110] sm:$0xff]
                  %320 = vst [vmem:[%s298 + $0x50] sm:$0xff] %v319
                  %v321 = vld [vmem:[%s297 + $0x118] sm:$0xff]
                  %322 = vst [vmem:[%s298 + $0x58] sm:$0xff] %v321
                  %v323 = vld [vmem:[%s297 + $0x120] sm:$0xff]
                  %324 = vst [vmem:[%s298 + $0x60] sm:$0xff] %v323
                  %v325 = vld [vmem:[%s297 + $0x128] sm:$0xff]
                  %326 = vst [vmem:[%s298 + $0x68] sm:$0xff] %v325
                  %v327 = vld [vmem:[%s297 + $0x130] sm:$0xff]
                  %328 = vst [vmem:[%s298 + $0x70] sm:$0xff] %v327
                  %v329 = vld [vmem:[%s297 + $0x138] sm:$0xff]
                  %330 = vst [vmem:[%s298 + $0x78] sm:$0xff] %v329
                  %v331 = vld [vmem:[%s297 + $0x200] sm:$0xff]
                  %332 = vst [vmem:[%s298 + $0x80] sm:$0xff] %v331
                  %v333 = vld [vmem:[%s297 + $0x208] sm:$0xff]
                  %334 = vst [vmem:[%s298 + $0x88] sm:$0xff] %v333
                  %v335 = vld [vmem:[%s297 + $0x210] sm:$0xff]
                  %336 = vst [vmem:[%s298 + $0x90] sm:$0xff] %v335
                  %v337 = vld [vmem:[%s297 + $0x218] sm:$0xff]
                  %338 = vst [vmem:[%s298 + $0x98] sm:$0xff] %v337
                  %v339 = vld [vmem:[%s297 + $0x220] sm:$0xff]
                  %340 = vst [vmem:[%s298 + $0xa0] sm:$0xff] %v339
                  %v341 = vld [vmem:[%s297 + $0x228] sm:$0xff]
                  %342 = vst [vmem:[%s298 + $0xa8] sm:$0xff] %v341
                  %v343 = vld [vmem:[%s297 + $0x230] sm:$0xff]
                  %344 = vst [vmem:[%s298 + $0xb0] sm:$0xff] %v343
                  %v345 = vld [vmem:[%s297 + $0x238] sm:$0xff]
                  %346 = vst [vmem:[%s298 + $0xb8] sm:$0xff] %v345
                $region52: #{tpu_custom_call.1} parent=46 // loop_footer
                  %s296 = sadd.s32 1, %s292
                $region53: #{tpu_custom_call.1} parent=46 // loop_footer_branch
                  %291 = sbr.rel target = $region49
                $region54: #{tpu_custom_call.1} parent=46 // loop_exit
                  _
              $region47: #{tpu_custom_call.1} parent=31 // pred_fallthru
                _
              // Predicated region
              $region55: #{tpu_custom_call.1} parent=31 // pred_check
                _
              $region56: #{tpu_custom_call.1} parent=31 // pred_check_branch
                %348 = sbr.rel target = $region58
              $region57: #{tpu_custom_call.1} parent=31 // pred_region
                _
              $region58: #{tpu_custom_call.1} parent=31 // pred_fallthru
                _
            $region32: #{tpu_custom_call.1} parent=27 // pred_fallthru
              _
            // Predicated region
            $region33: #{tpu_custom_call.1} parent=27 // pred_check
              _
            $region34: #{tpu_custom_call.1} parent=27 // pred_check_branch
              %231 = sbr.rel target = $region36
            $region35: #{tpu_custom_call.1} parent=27 // pred_region
              loop: start=0, step=1, limit=1
              $region37: #{tpu_custom_call.1} parent=35 // loop_pre_header
                _
              $region38: #{tpu_custom_call.1} parent=35 // loop_header
                %s234 = sphi 0, %s238
                %p235 = scmp.ge.s32.totalorder %s234, 1
                %s239 = sphi %s225, %s225
                %s240 = sphi %s220, %s220
              $region39: #{tpu_custom_call.1} parent=35 // loop_header_branch
                %237 = sbr.rel (%p235) target = $region43
              $region40: #{tpu_custom_call.1} parent=35 // loop_body
                %v241 = vld [vmem:[%s239] sm:$0xff]
                %242 = vst [vmem:[%s240] sm:$0xff] %v241
                %v243 = vld [vmem:[%s239 + $0x8] sm:$0xff]
                %244 = vst [vmem:[%s240 + $0x8] sm:$0xff] %v243
                %v245 = vld [vmem:[%s239 + $0x10] sm:$0xff]
                %246 = vst [vmem:[%s240 + $0x10] sm:$0xff] %v245
                %v247 = vld [vmem:[%s239 + $0x18] sm:$0xff]
                %248 = vst [vmem:[%s240 + $0x18] sm:$0xff] %v247
                %v249 = vld [vmem:[%s239 + $0x20] sm:$0xff]
                %250 = vst [vmem:[%s240 + $0x20] sm:$0xff] %v249
                %v251 = vld [vmem:[%s239 + $0x28] sm:$0xff]
                %252 = vst [vmem:[%s240 + $0x28] sm:$0xff] %v251
                %v253 = vld [vmem:[%s239 + $0x30] sm:$0xff]
                %254 = vst [vmem:[%s240 + $0x30] sm:$0xff] %v253
                %v255 = vld [vmem:[%s239 + $0x38] sm:$0xff]
                %256 = vst [vmem:[%s240 + $0x38] sm:$0xff] %v255
                %v257 = vld [vmem:[%s239 + $0x100] sm:$0xff]
                %258 = vst [vmem:[%s240 + $0x40] sm:$0xff] %v257
                %v259 = vld [vmem:[%s239 + $0x108] sm:$0xff]
                %260 = vst [vmem:[%s240 + $0x48] sm:$0xff] %v259
                %v261 = vld [vmem:[%s239 + $0x110] sm:$0xff]
                %262 = vst [vmem:[%s240 + $0x50] sm:$0xff] %v261
                %v263 = vld [vmem:[%s239 + $0x118] sm:$0xff]
                %264 = vst [vmem:[%s240 + $0x58] sm:$0xff] %v263
                %v265 = vld [vmem:[%s239 + $0x120] sm:$0xff]
                %266 = vst [vmem:[%s240 + $0x60] sm:$0xff] %v265
                %v267 = vld [vmem:[%s239 + $0x128] sm:$0xff]
                %268 = vst [vmem:[%s240 + $0x68] sm:$0xff] %v267
                %v269 = vld [vmem:[%s239 + $0x130] sm:$0xff]
                %270 = vst [vmem:[%s240 + $0x70] sm:$0xff] %v269
                %v271 = vld [vmem:[%s239 + $0x138] sm:$0xff]
                %272 = vst [vmem:[%s240 + $0x78] sm:$0xff] %v271
                %v273 = vld [vmem:[%s239 + $0x200] sm:$0xff]
                %274 = vst [vmem:[%s240 + $0x80] sm:$0xff] %v273
                %v275 = vld [vmem:[%s239 + $0x208] sm:$0xff]
                %276 = vst [vmem:[%s240 + $0x88] sm:$0xff] %v275
                %v277 = vld [vmem:[%s239 + $0x210] sm:$0xff]
                %278 = vst [vmem:[%s240 + $0x90] sm:$0xff] %v277
                %v279 = vld [vmem:[%s239 + $0x218] sm:$0xff]
                %280 = vst [vmem:[%s240 + $0x98] sm:$0xff] %v279
                %v281 = vld [vmem:[%s239 + $0x220] sm:$0xff]
                %282 = vst [vmem:[%s240 + $0xa0] sm:$0xff] %v281
                %v283 = vld [vmem:[%s239 + $0x228] sm:$0xff]
                %284 = vst [vmem:[%s240 + $0xa8] sm:$0xff] %v283
                %v285 = vld [vmem:[%s239 + $0x230] sm:$0xff]
                %286 = vst [vmem:[%s240 + $0xb0] sm:$0xff] %v285
                %v287 = vld [vmem:[%s239 + $0x238] sm:$0xff]
                %288 = vst [vmem:[%s240 + $0xb8] sm:$0xff] %v287
              $region41: #{tpu_custom_call.1} parent=35 // loop_footer
                %s238 = sadd.s32 1, %s234
              $region42: #{tpu_custom_call.1} parent=35 // loop_footer_branch
                %233 = sbr.rel target = $region38
              $region43: #{tpu_custom_call.1} parent=35 // loop_exit
                _
            $region36: #{tpu_custom_call.1} parent=27 // pred_fallthru
              _
          $region28: #{tpu_custom_call.1} parent=23 // pred_fallthru
            _
          %349 = vnop
        $region24: #{tpu_custom_call.1} parent=15 // pred_fallthru
          _
        // Predicated region
        $region59: #{tpu_custom_call.1} parent=15 // pred_check
          %p350 = pneg %p114
        $region60: #{tpu_custom_call.1} parent=15 // pred_check_branch
          %352 = sbr.rel (%p350) target = $region62
        $region61: #{tpu_custom_call.1} parent=15 // pred_region
          #allocation12 [shape = 'u32[6]{0}', space=smem, size = 0x18, scoped, tag = 'DMA stride descriptor']
          %s353 = sand.u32 %s104, 1
          %s354 = scalar_lea.sflag [#allocation7], %s353
          %s355 = sand.u32 %s104, 1
          %s356 = smul.addr %s355, 384
          %s357 = scalar_lea.vmem [#allocation6], %s356
          %s358 = smul.u32 %s25, 2
          %s359 = sadd.s32 %s358, %s26
          %s360 = smul.u32 8, %s359
          %s362 = ssub.s32 6144, 6144
          %363 = vsyncadd %s354, %s362
          %s364 = smul.addr %s360, 3
          %s365 = smul.addr %s364, 128
          %s366 = scalar_lea.hbm %s2, %s365
          %s368 = sshll.u32 1, 14
          %s369 = sxor.u32 4294967295, %s368
          %s371 = sld [smem:[#allocation0]]
          %s372 = sadd.s32 2, %s371
          %s374 = sshll.u32 7, 26
          %s375 = sxor.u32 4294967295, %s374
          %s376 = sand.u32 0, %s375
          %s377 = sshll.u32 %s372, 26
          %s378 = sor.u32 %s376, %s377
          %s379 = sshll.u32 %s357, 4
          %s380 = int_to_ptr.vmem [resolvable:$true] %s379
          %386 = sst [smem:[#allocation12]] 12288
          %s387 = scalar_lea.smem [#allocation12], 1
          %388 = sst [smem:[%s387]] 3072
          %s389 = scalar_lea.smem [#allocation12], 2
          %390 = sst [smem:[%s389]] 8
          %s391 = scalar_lea.smem [#allocation12], 3
          %392 = sst [smem:[%s391]] 384
          %s393 = scalar_lea.smem [#allocation12], 4
          %394 = sst [smem:[%s393]] 384
          %s395 = scalar_lea.smem [#allocation12], 5
          %396 = sst [smem:[%s395]] 24
          %398 = dma.general %s366, 6144, %s380, %s354, [#allocation11], [#allocation12], %s378, 0
        $region62: #{tpu_custom_call.1} parent=15 // pred_fallthru
          _
      $region16: #{tpu_custom_call.1} parent=5 // pred_fallthru
        _
      %p399 = scmp.le.s32.totalorder 1, %s18
      %p400 = scmp.lt.s32.totalorder %s18, 5
      %p401 = pnand %p399, %p400
      %p402 = pneg %p401
      // Predicated region
      $region63: #{tpu_custom_call.1} parent=5 // pred_check
        _
      $region64: #{tpu_custom_call.1} parent=5 // pred_check_branch
        %404 = sbr.rel (%p401) target = $region66
      $region65: #{tpu_custom_call.1} parent=5 // pred_region
        %s405 = ssub.s32 %s18, 1
        %s406 = sand.u32 %s47, 1
        %s407 = scalar_lea.sflag [#allocation3], %s406
        %s408 = sand.u32 %s47, 1
        %s409 = smul.addr %s408, 576
        %s410 = scalar_lea.vmem [#allocation2], %s409
        // Predicated region
        $region67: #{tpu_custom_call.1} parent=65 // pred_check
          %p411 = pneg %p60
        $region68: #{tpu_custom_call.1} parent=65 // pred_check_branch
          %413 = sbr.rel (%p411) target = $region70
        $region69: #{tpu_custom_call.1} parent=65 // pred_region
          %414 = dma.done %s407, 9216
        $region70: #{tpu_custom_call.1} parent=65 // pred_fallthru
          _
        %s415 = sand.u32 %s77, 1
        %s416 = sand.u32 %s77, 1
        %s417 = smul.addr %s416, 192
        %s418 = scalar_lea.vmem [#allocation5], %s417
        // Predicated region
        $region71: #{tpu_custom_call.1} parent=65 // pred_check
          %p419 = pneg %p90
        $region72: #{tpu_custom_call.1} parent=65 // pred_check_branch
          %421 = sbr.rel (%p419) target = $region74
        $region73: #{tpu_custom_call.1} parent=65 // pred_region
          _
        $region74: #{tpu_custom_call.1} parent=65 // pred_fallthru
          _
        %s422 = sand.u32 %s107, 1
        %s423 = scalar_lea.sflag [#allocation7], %s422
        %s424 = sand.u32 %s107, 1
        %s425 = smul.addr %s424, 384
        %s426 = scalar_lea.vmem [#allocation6], %s425
        // Predicated region
        $region75: #{tpu_custom_call.1} parent=65 // pred_check
          %p427 = pneg %p120
        $region76: #{tpu_custom_call.1} parent=65 // pred_check_branch
          %429 = sbr.rel (%p427) target = $region78
        $region77: #{tpu_custom_call.1} parent=65 // pred_region
          %430 = dma.done %s423, 6144
        $region78: #{tpu_custom_call.1} parent=65 // pred_fallthru
          _
        %s431 = sand.u32 %s47, 1
        %s432 = scalar_lea.sflag [#allocation3], %s431
        %s433 = sand.u32 %s47, 1
        %s434 = smul.addr %s433, 576
        %s435 = scalar_lea.vmem [#allocation2], %s434
        %p436 = pneg %p60
        %p437 = pneg %p57
        %s438 = sand.u32 %s77, 1
        %s439 = sand.u32 %s77, 1
        %s440 = smul.addr %s439, 192
        %s441 = scalar_lea.vmem [#allocation5], %s440
        %p442 = pneg %p90
        %p443 = pneg %p87
        %s444 = sand.u32 %s107, 1
        %s445 = scalar_lea.sflag [#allocation7], %s444
        %s446 = sand.u32 %s107, 1
        %s447 = smul.addr %s446, 384
        %s448 = scalar_lea.vmem [#allocation6], %s447
        %p449 = pneg %p120
        %p450 = pneg %p117
        %p451 = pneg %p146
        %p452 = pneg %p143
        %s453 = sand.u32 %s133, 1
        %s454 = scalar_lea.sflag [#allocation4], %s453
        %s455 = sand.u32 %s133, 1
        %s456 = smul.addr %s455, 8
        %s457 = scalar_lea.vmem [#allocation8], %s456
        %s458 = smul.u32 %s27, 2
        %s459 = sadd.s32 %s458, %s28
        %s460 = smul.u32 8, %s459
        %s461 = smul.u32 %s27, 2
        %s462 = sadd.s32 %s461, %s28
        %s463 = smul.u32 8, %s462
        %s464 = smul.u32 %s27, 2
        %s465 = sadd.s32 %s464, %s28
        %s466 = smul.u32 8, %s465
        %p467 = scmp.eq.s32.totalorder %s28, 0
        // Predicated region
        $region79: #{tpu_custom_call.1} parent=65 // pred_check
          %p468 = pneg %p467
        $region80: #{tpu_custom_call.1} parent=65 // pred_check_branch
          %470 = sbr.rel (%p468) target = $region82
        $region81: #{tpu_custom_call.1} parent=65 // pred_region
          %471 = vst [vmem:[%s457] sm:$0xff] 0.0
        $region82: #{tpu_custom_call.1} parent=65 // pred_fallthru
          _
        %v472 = vld [vmem:[%s410] sm:$0xff]
        %v473 = vld [vmem:[%s410 + $0x8] sm:$0xff]
        %v474 = vld [vmem:[%s410 + $0x10] sm:$0xff]
        %v475 = vld [vmem:[%s410 + $0x18] sm:$0xff]
        %v476 = vld [vmem:[%s410 + $0x20] sm:$0xff]
        %v477 = vld [vmem:[%s410 + $0x28] sm:$0xff]
        %v478 = vld [vmem:[%s410 + $0x30] sm:$0xff]
        %v479 = vld [vmem:[%s410 + $0x38] sm:$0xff]
        %v480 = vld [vmem:[%s410 + $0x40] sm:$0xff]
        %v481 = vld [vmem:[%s410 + $0x48] sm:$0xff]
        %v482 = vld [vmem:[%s410 + $0x50] sm:$0xff]
        %v483 = vld [vmem:[%s410 + $0x58] sm:$0xff]
        %v484 = vld [vmem:[%s410 + $0x60] sm:$0xff]
        %v485 = vld [vmem:[%s410 + $0x68] sm:$0xff]
        %v486 = vld [vmem:[%s410 + $0x70] sm:$0xff]
        %v487 = vld [vmem:[%s410 + $0x78] sm:$0xff]
        %v488 = vld [vmem:[%s410 + $0x80] sm:$0xff]
        %v489 = vld [vmem:[%s410 + $0x88] sm:$0xff]
        %v490 = vld [vmem:[%s410 + $0x90] sm:$0xff]
        %v491 = vld [vmem:[%s410 + $0x98] sm:$0xff]
        %v492 = vld [vmem:[%s410 + $0xa0] sm:$0xff]
        %v493 = vld [vmem:[%s410 + $0xa8] sm:$0xff]
        %v494 = vld [vmem:[%s410 + $0xb0] sm:$0xff]
        %v495 = vld [vmem:[%s410 + $0xb8] sm:$0xff]
        %s496 = scalar_lea.vmem %s410, 192 [#allocation2]
        %v497 = vld [vmem:[%s496] sm:$0xff]
        %v498 = vld [vmem:[%s496 + $0x8] sm:$0xff]
        %v499 = vld [vmem:[%s496 + $0x10] sm:$0xff]
        %v500 = vld [vmem:[%s496 + $0x18] sm:$0xff]
        %v501 = vld [vmem:[%s496 + $0x20] sm:$0xff]
        %v502 = vld [vmem:[%s496 + $0x28] sm:$0xff]
        %v503 = vld [vmem:[%s496 + $0x30] sm:$0xff]
        %v504 = vld [vmem:[%s496 + $0x38] sm:$0xff]
        %v505 = vld [vmem:[%s496 + $0x40] sm:$0xff]
        %v506 = vld [vmem:[%s496 + $0x48] sm:$0xff]
        %v507 = vld [vmem:[%s496 + $0x50] sm:$0xff]
        %v508 = vld [vmem:[%s496 + $0x58] sm:$0xff]
        %v509 = vld [vmem:[%s496 + $0x60] sm:$0xff]
        %v510 = vld [vmem:[%s496 + $0x68] sm:$0xff]
        %v511 = vld [vmem:[%s496 + $0x70] sm:$0xff]
        %v512 = vld [vmem:[%s496 + $0x78] sm:$0xff]
        %v513 = vld [vmem:[%s496 + $0x80] sm:$0xff]
        %v514 = vld [vmem:[%s496 + $0x88] sm:$0xff]
        %v515 = vld [vmem:[%s496 + $0x90] sm:$0xff]
        %v516 = vld [vmem:[%s496 + $0x98] sm:$0xff]
        %v517 = vld [vmem:[%s496 + $0xa0] sm:$0xff]
        %v518 = vld [vmem:[%s496 + $0xa8] sm:$0xff]
        %v519 = vld [vmem:[%s496 + $0xb0] sm:$0xff]
        %v520 = vld [vmem:[%s496 + $0xb8] sm:$0xff]
        %s521 = scalar_lea.vmem %s410, 384 [#allocation2]
        %v522 = vld [vmem:[%s521] sm:$0xff]
        %v523 = vld [vmem:[%s521 + $0x8] sm:$0xff]
        %v524 = vld [vmem:[%s521 + $0x10] sm:$0xff]
        %v525 = vld [vmem:[%s521 + $0x18] sm:$0xff]
        %v526 = vld [vmem:[%s521 + $0x20] sm:$0xff]
        %v527 = vld [vmem:[%s521 + $0x28] sm:$0xff]
        %v528 = vld [vmem:[%s521 + $0x30] sm:$0xff]
        %v529 = vld [vmem:[%s521 + $0x38] sm:$0xff]
        %v530 = vld [vmem:[%s521 + $0x40] sm:$0xff]
        %v531 = vld [vmem:[%s521 + $0x48] sm:$0xff]
        %v532 = vld [vmem:[%s521 + $0x50] sm:$0xff]
        %v533 = vld [vmem:[%s521 + $0x58] sm:$0xff]
        %v534 = vld [vmem:[%s521 + $0x60] sm:$0xff]
        %v535 = vld [vmem:[%s521 + $0x68] sm:$0xff]
        %v536 = vld [vmem:[%s521 + $0x70] sm:$0xff]
        %v537 = vld [vmem:[%s521 + $0x78] sm:$0xff]
        %v538 = vld [vmem:[%s521 + $0x80] sm:$0xff]
        %v539 = vld [vmem:[%s521 + $0x88] sm:$0xff]
        %v540 = vld [vmem:[%s521 + $0x90] sm:$0xff]
        %v541 = vld [vmem:[%s521 + $0x98] sm:$0xff]
        %v542 = vld [vmem:[%s521 + $0xa0] sm:$0xff]
        %v543 = vld [vmem:[%s521 + $0xa8] sm:$0xff]
        %v544 = vld [vmem:[%s521 + $0xb0] sm:$0xff]
        %v545 = vld [vmem:[%s521 + $0xb8] sm:$0xff]
        %v546 = vld [vmem:[%s418] sm:$0xff]
        %v547 = vld [vmem:[%s418 + $0x8] sm:$0xff]
        %v548 = vld [vmem:[%s418 + $0x10] sm:$0xff]
        %v549 = vld [vmem:[%s418 + $0x18] sm:$0xff]
        %v550 = vld [vmem:[%s418 + $0x20] sm:$0xff]
        %v551 = vld [vmem:[%s418 + $0x28] sm:$0xff]
        %v552 = vld [vmem:[%s418 + $0x30] sm:$0xff]
        %v553 = vld [vmem:[%s418 + $0x38] sm:$0xff]
        %s554 = scalar_lea.vmem %s418, 64 [#allocation5]
        %v555 = vld [vmem:[%s554] sm:$0xff]
        %v556 = vld [vmem:[%s554 + $0x8] sm:$0xff]
        %v557 = vld [vmem:[%s554 + $0x10] sm:$0xff]
        %v558 = vld [vmem:[%s554 + $0x18] sm:$0xff]
        %v559 = vld [vmem:[%s554 + $0x20] sm:$0xff]
        %v560 = vld [vmem:[%s554 + $0x28] sm:$0xff]
        %v561 = vld [vmem:[%s554 + $0x30] sm:$0xff]
        %v562 = vld [vmem:[%s554 + $0x38] sm:$0xff]
        %s563 = scalar_lea.vmem %s418, 128 [#allocation5]
        %v564 = vld [vmem:[%s563] sm:$0xff]
        %v565 = vld [vmem:[%s563 + $0x8] sm:$0xff]
        %v566 = vld [vmem:[%s563 + $0x10] sm:$0xff]
        %v567 = vld [vmem:[%s563 + $0x18] sm:$0xff]
        %v568 = vld [vmem:[%s563 + $0x20] sm:$0xff]
        %v569 = vld [vmem:[%s563 + $0x28] sm:$0xff]
        %v570 = vld [vmem:[%s563 + $0x30] sm:$0xff]
        %v571 = vld [vmem:[%s563 + $0x38] sm:$0xff]
        %v572 = vld [vmem:[%s426] sm:$0xff]
        %v573 = vld [vmem:[%s426 + $0x8] sm:$0xff]
        %v574 = vld [vmem:[%s426 + $0x10] sm:$0xff]
        %v575 = vld [vmem:[%s426 + $0x18] sm:$0xff]
        %v576 = vld [vmem:[%s426 + $0x20] sm:$0xff]
        %v577 = vld [vmem:[%s426 + $0x28] sm:$0xff]
        %v578 = vld [vmem:[%s426 + $0x30] sm:$0xff]
        %v579 = vld [vmem:[%s426 + $0x38] sm:$0xff]
        %v580 = vld [vmem:[%s426 + $0x40] sm:$0xff]
        %v581 = vld [vmem:[%s426 + $0x48] sm:$0xff]
        %v582 = vld [vmem:[%s426 + $0x50] sm:$0xff]
        %v583 = vld [vmem:[%s426 + $0x58] sm:$0xff]
        %v584 = vld [vmem:[%s426 + $0x60] sm:$0xff]
        %v585 = vld [vmem:[%s426 + $0x68] sm:$0xff]
        %v586 = vld [vmem:[%s426 + $0x70] sm:$0xff]
        %v587 = vld [vmem:[%s426 + $0x78] sm:$0xff]
        %v588 = vld [vmem:[%s426 + $0x80] sm:$0xff]
        %v589 = vld [vmem:[%s426 + $0x88] sm:$0xff]
        %v590 = vld [vmem:[%s426 + $0x90] sm:$0xff]
        %v591 = vld [vmem:[%s426 + $0x98] sm:$0xff]
        %v592 = vld [vmem:[%s426 + $0xa0] sm:$0xff]
        %v593 = vld [vmem:[%s426 + $0xa8] sm:$0xff]
        %v594 = vld [vmem:[%s426 + $0xb0] sm:$0xff]
        %v595 = vld [vmem:[%s426 + $0xb8] sm:$0xff]
        %s596 = scalar_lea.vmem %s426, 192 [#allocation6]
        %v597 = vld [vmem:[%s596] sm:$0xff]
        %v598 = vld [vmem:[%s596 + $0x8] sm:$0xff]
        %v599 = vld [vmem:[%s596 + $0x10] sm:$0xff]
        %v600 = vld [vmem:[%s596 + $0x18] sm:$0xff]
        %v601 = vld [vmem:[%s596 + $0x20] sm:$0xff]
        %v602 = vld [vmem:[%s596 + $0x28] sm:$0xff]
        %v603 = vld [vmem:[%s596 + $0x30] sm:$0xff]
        %v604 = vld [vmem:[%s596 + $0x38] sm:$0xff]
        %v605 = vld [vmem:[%s596 + $0x40] sm:$0xff]
        %v606 = vld [vmem:[%s596 + $0x48] sm:$0xff]
        %v607 = vld [vmem:[%s596 + $0x50] sm:$0xff]
        %v608 = vld [vmem:[%s596 + $0x58] sm:$0xff]
        %v609 = vld [vmem:[%s596 + $0x60] sm:$0xff]
        %v610 = vld [vmem:[%s596 + $0x68] sm:$0xff]
        %v611 = vld [vmem:[%s596 + $0x70] sm:$0xff]
        %v612 = vld [vmem:[%s596 + $0x78] sm:$0xff]
        %v613 = vld [vmem:[%s596 + $0x80] sm:$0xff]
        %v614 = vld [vmem:[%s596 + $0x88] sm:$0xff]
        %v615 = vld [vmem:[%s596 + $0x90] sm:$0xff]
        %v616 = vld [vmem:[%s596 + $0x98] sm:$0xff]
        %v617 = vld [vmem:[%s596 + $0xa0] sm:$0xff]
        %v618 = vld [vmem:[%s596 + $0xa8] sm:$0xff]
        %v619 = vld [vmem:[%s596 + $0xb0] sm:$0xff]
        %v620 = vld [vmem:[%s596 + $0xb8] sm:$0xff]
        %v621 = vmul.f32 %v472, 1.75
        %v622 = vmul.f32 %v473, 1.75
        %v623 = vmul.f32 %v474, 1.75
        %v624 = vmul.f32 %v475, 1.75
        %v625 = vmul.f32 %v476, 1.75
        %v626 = vmul.f32 %v477, 1.75
        %v627 = vmul.f32 %v478, 1.75
        %v628 = vmul.f32 %v479, 1.75
        %v629 = vmul.f32 %v480, 1.75
        %v630 = vmul.f32 %v481, 1.75
        %v631 = vmul.f32 %v482, 1.75
        %v632 = vmul.f32 %v483, 1.75
        %v633 = vmul.f32 %v484, 1.75
        %v634 = vmul.f32 %v485, 1.75
        %v635 = vmul.f32 %v486, 1.75
        %v636 = vmul.f32 %v487, 1.75
        %v637 = vmul.f32 %v488, 1.75
        %v638 = vmul.f32 %v489, 1.75
        %v639 = vmul.f32 %v490, 1.75
        %v640 = vmul.f32 %v491, 1.75
        %v641 = vmul.f32 %v492, 1.75
        %v642 = vmul.f32 %v493, 1.75
        %v643 = vmul.f32 %v494, 1.75
        %v644 = vmul.f32 %v495, 1.75
        %646 = vset.pattern.permute.xlu0 0
        %647 = vperm.xlu0 %646, %v546
        %v648 = vpop.permute.xlu0 %647
        %651 = vset.pattern.permute.xlu0 0
        %652 = vperm.xlu0 %651, %v547
        %v653 = vpop.permute.xlu0 %652
        %656 = vset.pattern.permute.xlu0 0
        %657 = vperm.xlu0 %656, %v548
        %v658 = vpop.permute.xlu0 %657
        %661 = vset.pattern.permute.xlu0 0
        %662 = vperm.xlu0 %661, %v549
        %v663 = vpop.permute.xlu0 %662
        %666 = vset.pattern.permute.xlu0 0
        %667 = vperm.xlu0 %666, %v550
        %v668 = vpop.permute.xlu0 %667
        %671 = vset.pattern.permute.xlu0 0
        %672 = vperm.xlu0 %671, %v551
        %v673 = vpop.permute.xlu0 %672
        %676 = vset.pattern.permute.xlu0 0
        %677 = vperm.xlu0 %676, %v552
        %v678 = vpop.permute.xlu0 %677
        %681 = vset.pattern.permute.xlu0 0
        %682 = vperm.xlu0 %681, %v553
        %v683 = vpop.permute.xlu0 %682
        %v685 = vadd.f32 %v621, %v648
        %v686 = vadd.f32 %v622, %v648
        %v687 = vadd.f32 %v623, %v648
        %v688 = vadd.f32 %v624, %v653
        %v689 = vadd.f32 %v625, %v653
        %v690 = vadd.f32 %v626, %v653
        %v691 = vadd.f32 %v627, %v658
        %v692 = vadd.f32 %v628, %v658
        %v693 = vadd.f32 %v629, %v658
        %v694 = vadd.f32 %v630, %v663
        %v695 = vadd.f32 %v631, %v663
        %v696 = vadd.f32 %v632, %v663
        %v697 = vadd.f32 %v633, %v668
        %v698 = vadd.f32 %v634, %v668
        %v699 = vadd.f32 %v635, %v668
        %v700 = vadd.f32 %v636, %v673
        %v701 = vadd.f32 %v637, %v673
        %v702 = vadd.f32 %v638, %v673
        %v703 = vadd.f32 %v639, %v678
        %v704 = vadd.f32 %v640, %v678
        %v705 = vadd.f32 %v641, %v678
        %v706 = vadd.f32 %v642, %v683
        %v707 = vadd.f32 %v643, %v683
        %v708 = vadd.f32 %v644, %v683
        %v709 = vmul.f32 %v497, 1.75
        %v710 = vmul.f32 %v498, 1.75
        %v711 = vmul.f32 %v499, 1.75
        %v712 = vmul.f32 %v500, 1.75
        %v713 = vmul.f32 %v501, 1.75
        %v714 = vmul.f32 %v502, 1.75
        %v715 = vmul.f32 %v503, 1.75
        %v716 = vmul.f32 %v504, 1.75
        %v717 = vmul.f32 %v505, 1.75
        %v718 = vmul.f32 %v506, 1.75
        %v719 = vmul.f32 %v507, 1.75
        %v720 = vmul.f32 %v508, 1.75
        %v721 = vmul.f32 %v509, 1.75
        %v722 = vmul.f32 %v510, 1.75
        %v723 = vmul.f32 %v511, 1.75
        %v724 = vmul.f32 %v512, 1.75
        %v725 = vmul.f32 %v513, 1.75
        %v726 = vmul.f32 %v514, 1.75
        %v727 = vmul.f32 %v515, 1.75
        %v728 = vmul.f32 %v516, 1.75
        %v729 = vmul.f32 %v517, 1.75
        %v730 = vmul.f32 %v518, 1.75
        %v731 = vmul.f32 %v519, 1.75
        %v732 = vmul.f32 %v520, 1.75
        %734 = vset.pattern.permute.xlu0 0
        %735 = vperm.xlu0 %734, %v555
        %v736 = vpop.permute.xlu0 %735
        %739 = vset.pattern.permute.xlu0 0
        %740 = vperm.xlu0 %739, %v556
        %v741 = vpop.permute.xlu0 %740
        %744 = vset.pattern.permute.xlu0 0
        %745 = vperm.xlu0 %744, %v557
        %v746 = vpop.permute.xlu0 %745
        %749 = vset.pattern.permute.xlu0 0
        %750 = vperm.xlu0 %749, %v558
        %v751 = vpop.permute.xlu0 %750
        %754 = vset.pattern.permute.xlu0 0
        %755 = vperm.xlu0 %754, %v559
        %v756 = vpop.permute.xlu0 %755
        %759 = vset.pattern.permute.xlu0 0
        %760 = vperm.xlu0 %759, %v560
        %v761 = vpop.permute.xlu0 %760
        %764 = vset.pattern.permute.xlu0 0
        %765 = vperm.xlu0 %764, %v561
        %v766 = vpop.permute.xlu0 %765
        %769 = vset.pattern.permute.xlu0 0
        %770 = vperm.xlu0 %769, %v562
        %v771 = vpop.permute.xlu0 %770
        %v773 = vadd.f32 %v709, %v736
        %v774 = vadd.f32 %v710, %v736
        %v775 = vadd.f32 %v711, %v736
        %v776 = vadd.f32 %v712, %v741
        %v777 = vadd.f32 %v713, %v741
        %v778 = vadd.f32 %v714, %v741
        %v779 = vadd.f32 %v715, %v746
        %v780 = vadd.f32 %v716, %v746
        %v781 = vadd.f32 %v717, %v746
        %v782 = vadd.f32 %v718, %v751
        %v783 = vadd.f32 %v719, %v751
        %v784 = vadd.f32 %v720, %v751
        %v785 = vadd.f32 %v721, %v756
        %v786 = vadd.f32 %v722, %v756
        %v787 = vadd.f32 %v723, %v756
        %v788 = vadd.f32 %v724, %v761
        %v789 = vadd.f32 %v725, %v761
        %v790 = vadd.f32 %v726, %v761
        %v791 = vadd.f32 %v727, %v766
        %v792 = vadd.f32 %v728, %v766
        %v793 = vadd.f32 %v729, %v766
        %v794 = vadd.f32 %v730, %v771
        %v795 = vadd.f32 %v731, %v771
        %v796 = vadd.f32 %v732, %v771
        %v797 = vmul.f32 %v522, 1.75
        %v798 = vmul.f32 %v523, 1.75
        %v799 = vmul.f32 %v524, 1.75
        %v800 = vmul.f32 %v525, 1.75
        %v801 = vmul.f32 %v526, 1.75
        %v802 = vmul.f32 %v527, 1.75
        %v803 = vmul.f32 %v528, 1.75
        %v804 = vmul.f32 %v529, 1.75
        %v805 = vmul.f32 %v530, 1.75
        %v806 = vmul.f32 %v531, 1.75
        %v807 = vmul.f32 %v532, 1.75
        %v808 = vmul.f32 %v533, 1.75
        %v809 = vmul.f32 %v534, 1.75
        %v810 = vmul.f32 %v535, 1.75
        %v811 = vmul.f32 %v536, 1.75
        %v812 = vmul.f32 %v537, 1.75
        %v813 = vmul.f32 %v538, 1.75
        %v814 = vmul.f32 %v539, 1.75
        %v815 = vmul.f32 %v540, 1.75
        %v816 = vmul.f32 %v541, 1.75
        %v817 = vmul.f32 %v542, 1.75
        %v818 = vmul.f32 %v543, 1.75
        %v819 = vmul.f32 %v544, 1.75
        %v820 = vmul.f32 %v545, 1.75
        %822 = vset.pattern.permute.xlu0 0
        %823 = vperm.xlu0 %822, %v564
        %v824 = vpop.permute.xlu0 %823
        %827 = vset.pattern.permute.xlu0 0
        %828 = vperm.xlu0 %827, %v565
        %v829 = vpop.permute.xlu0 %828
        %832 = vset.pattern.permute.xlu0 0
        %833 = vperm.xlu0 %832, %v566
        %v834 = vpop.permute.xlu0 %833
        %837 = vset.pattern.permute.xlu0 0
        %838 = vperm.xlu0 %837, %v567
        %v839 = vpop.permute.xlu0 %838
        %842 = vset.pattern.permute.xlu0 0
        %843 = vperm.xlu0 %842, %v568
        %v844 = vpop.permute.xlu0 %843
        %847 = vset.pattern.permute.xlu0 0
        %848 = vperm.xlu0 %847, %v569
        %v849 = vpop.permute.xlu0 %848
        %852 = vset.pattern.permute.xlu0 0
        %853 = vperm.xlu0 %852, %v570
        %v854 = vpop.permute.xlu0 %853
        %857 = vset.pattern.permute.xlu0 0
        %858 = vperm.xlu0 %857, %v571
        %v859 = vpop.permute.xlu0 %858
        %v861 = vadd.f32 %v797, %v824
        %v862 = vadd.f32 %v798, %v824
        %v863 = vadd.f32 %v799, %v824
        %v864 = vadd.f32 %v800, %v829
        %v865 = vadd.f32 %v801, %v829
        %v866 = vadd.f32 %v802, %v829
        %v867 = vadd.f32 %v803, %v834
        %v868 = vadd.f32 %v804, %v834
        %v869 = vadd.f32 %v805, %v834
        %v870 = vadd.f32 %v806, %v839
        %v871 = vadd.f32 %v807, %v839
        %v872 = vadd.f32 %v808, %v839
        %v873 = vadd.f32 %v809, %v844
        %v874 = vadd.f32 %v810, %v844
        %v875 = vadd.f32 %v811, %v844
        %v876 = vadd.f32 %v812, %v849
        %v877 = vadd.f32 %v813, %v849
        %v878 = vadd.f32 %v814, %v849
        %v879 = vadd.f32 %v815, %v854
        %v880 = vadd.f32 %v816, %v854
        %v881 = vadd.f32 %v817, %v854
        %v882 = vadd.f32 %v818, %v859
        %v883 = vadd.f32 %v819, %v859
        %v884 = vadd.f32 %v820, %v859
        %s885 = smul.u32 %s27, 2
        %s886 = sadd.s32 %s885, %s28
        %v887 = vlaneseq
        %v888 = vshrl.u32 %v887, 7
        %v889 = vadd.s32 %v888, 8
        %v890 = vadd.s32 %v888, 16
        %v891 = vadd.s32 %v888, 24
        %v892 = vadd.s32 %v888, 32
        %v893 = vadd.s32 %v888, 40
        %v894 = vadd.s32 %v888, 48
        %v895 = vadd.s32 %v888, 56
        %s896 = smul.u32 %s886, 64
        %v897 = vstv %s896
        %v898 = vadd.s32 %v888, %v897
        %v899 = vadd.s32 %v889, %v897
        %v900 = vadd.s32 %v890, %v897
        %v901 = vadd.s32 %v891, %v897
        %v902 = vadd.s32 %v892, %v897
        %v903 = vadd.s32 %v893, %v897
        %v904 = vadd.s32 %v894, %v897
        %v905 = vadd.s32 %v895, %v897
        %v906 = vlaneseq
        %v907 = vand.u32 %v906, 127
        %v908 = vadd.s32 %v907, 128
        %v909 = vadd.s32 %v907, 256
        %vm910 = vcmp.lt.s32.totalorder %v898, 250
        %vm911 = vcmp.lt.s32.totalorder %v899, 250
        %vm912 = vcmp.lt.s32.totalorder %v900, 250
        %vm913 = vcmp.lt.s32.totalorder %v901, 250
        %vm914 = vcmp.lt.s32.totalorder %v902, 250
        %vm915 = vcmp.lt.s32.totalorder %v903, 250
        %vm916 = vcmp.lt.s32.totalorder %v904, 250
        %vm917 = vcmp.lt.s32.totalorder %v905, 250
        %vm918 = vcmp.lt.s32.totalorder %v907, 300
        %vm919 = vcmp.lt.s32.totalorder %v908, 300
        %vm920 = vcmp.lt.s32.totalorder %v909, 300
        %vm921 = vmand %vm910, %vm918
        %vm922 = vmand %vm910, %vm919
        %vm923 = vmand %vm910, %vm920
        %vm924 = vmand %vm911, %vm918
        %vm925 = vmand %vm911, %vm919
        %vm926 = vmand %vm911, %vm920
        %vm927 = vmand %vm912, %vm918
        %vm928 = vmand %vm912, %vm919
        %vm929 = vmand %vm912, %vm920
        %vm930 = vmand %vm913, %vm918
        %vm931 = vmand %vm913, %vm919
        %vm932 = vmand %vm913, %vm920
        %vm933 = vmand %vm914, %vm918
        %vm934 = vmand %vm914, %vm919
        %vm935 = vmand %vm914, %vm920
        %vm936 = vmand %vm915, %vm918
        %vm937 = vmand %vm915, %vm919
        %vm938 = vmand %vm915, %vm920
        %vm939 = vmand %vm916, %vm918
        %vm940 = vmand %vm916, %vm919
        %vm941 = vmand %vm916, %vm920
        %vm942 = vmand %vm917, %vm918
        %vm943 = vmand %vm917, %vm919
        %vm944 = vmand %vm917, %vm920
        %v945 = vsel %vm921, %v861, 1.0
        %v946 = vsel %vm922, %v862, 1.0
        %v947 = vsel %vm923, %v863, 1.0
        %v948 = vsel %vm924, %v864, 1.0
        %v949 = vsel %vm925, %v865, 1.0
        %v950 = vsel %vm926, %v866, 1.0
        %v951 = vsel %vm927, %v867, 1.0
        %v952 = vsel %vm928, %v868, 1.0
        %v953 = vsel %vm929, %v869, 1.0
        %v954 = vsel %vm930, %v870, 1.0
        %v955 = vsel %vm931, %v871, 1.0
        %v956 = vsel %vm932, %v872, 1.0
        %v957 = vsel %vm933, %v873, 1.0
        %v958 = vsel %vm934, %v874, 1.0
        %v959 = vsel %vm935, %v875, 1.0
        %v960 = vsel %vm936, %v876, 1.0
        %v961 = vsel %vm937, %v877, 1.0
        %v962 = vsel %vm938, %v878, 1.0
        %v963 = vsel %vm939, %v879, 1.0
        %v964 = vsel %vm940, %v880, 1.0
        %v965 = vsel %vm941, %v881, 1.0
        %v966 = vsel %vm942, %v882, 1.0
        %v967 = vsel %vm943, %v883, 1.0
        %v968 = vsel %vm944, %v884, 1.0
        %v969 = vrcp.pop %v945
        %v970 = vrcp.pop %v946
        %v971 = vrcp.pop %v947
        %v972 = vrcp.pop %v948
        %v973 = vrcp.pop %v949
        %v974 = vrcp.pop %v950
        %v975 = vrcp.pop %v951
        %v976 = vrcp.pop %v952
        %v977 = vrcp.pop %v953
        %v978 = vrcp.pop %v954
        %v979 = vrcp.pop %v955
        %v980 = vrcp.pop %v956
        %v981 = vrcp.pop %v957
        %v982 = vrcp.pop %v958
        %v983 = vrcp.pop %v959
        %v984 = vrcp.pop %v960
        %v985 = vrcp.pop %v961
        %v986 = vrcp.pop %v962
        %v987 = vrcp.pop %v963
        %v988 = vrcp.pop %v964
        %v989 = vrcp.pop %v965
        %v990 = vrcp.pop %v966
        %v991 = vrcp.pop %v967
        %v992 = vrcp.pop %v968
        %v993 = vmul.f32 %v685, 500.0
        %v994 = vmul.f32 %v686, 500.0
        %v995 = vmul.f32 %v687, 500.0
        %v996 = vmul.f32 %v688, 500.0
        %v997 = vmul.f32 %v689, 500.0
        %v998 = vmul.f32 %v690, 500.0
        %v999 = vmul.f32 %v691, 500.0
        %v1000 = vmul.f32 %v692, 500.0
        %v1001 = vmul.f32 %v693, 500.0
        %v1002 = vmul.f32 %v694, 500.0
        %v1003 = vmul.f32 %v695, 500.0
        %v1004 = vmul.f32 %v696, 500.0
        %v1005 = vmul.f32 %v697, 500.0
        %v1006 = vmul.f32 %v698, 500.0
        %v1007 = vmul.f32 %v699, 500.0
        %v1008 = vmul.f32 %v700, 500.0
        %v1009 = vmul.f32 %v701, 500.0
        %v1010 = vmul.f32 %v702, 500.0
        %v1011 = vmul.f32 %v703, 500.0
        %v1012 = vmul.f32 %v704, 500.0
        %v1013 = vmul.f32 %v705, 500.0
        %v1014 = vmul.f32 %v706, 500.0
        %v1015 = vmul.f32 %v707, 500.0
        %v1016 = vmul.f32 %v708, 500.0
        %v1017 = vmul.f32 %v861, 128.0
        %v1018 = vmul.f32 %v862, 128.0
        %v1019 = vmul.f32 %v863, 128.0
        %v1020 = vmul.f32 %v864, 128.0
        %v1021 = vmul.f32 %v865, 128.0
        %v1022 = vmul.f32 %v866, 128.0
        %v1023 = vmul.f32 %v867, 128.0
        %v1024 = vmul.f32 %v868, 128.0
        %v1025 = vmul.f32 %v869, 128.0
        %v1026 = vmul.f32 %v870, 128.0
        %v1027 = vmul.f32 %v871, 128.0
        %v1028 = vmul.f32 %v872, 128.0
        %v1029 = vmul.f32 %v873, 128.0
        %v1030 = vmul.f32 %v874, 128.0
        %v1031 = vmul.f32 %v875, 128.0
        %v1032 = vmul.f32 %v876, 128.0
        %v1033 = vmul.f32 %v877, 128.0
        %v1034 = vmul.f32 %v878, 128.0
        %v1035 = vmul.f32 %v879, 128.0
        %v1036 = vmul.f32 %v880, 128.0
        %v1037 = vmul.f32 %v881, 128.0
        %v1038 = vmul.f32 %v882, 128.0
        %v1039 = vmul.f32 %v883, 128.0
        %v1040 = vmul.f32 %v884, 128.0
        %v1041 = vadd.f32 %v993, %v1017
        %v1042 = vadd.f32 %v994, %v1018
        %v1043 = vadd.f32 %v995, %v1019
        %v1044 = vadd.f32 %v996, %v1020
        %v1045 = vadd.f32 %v997, %v1021
        %v1046 = vadd.f32 %v998, %v1022
        %v1047 = vadd.f32 %v999, %v1023
        %v1048 = vadd.f32 %v1000, %v1024
        %v1049 = vadd.f32 %v1001, %v1025
        %v1050 = vadd.f32 %v1002, %v1026
        %v1051 = vadd.f32 %v1003, %v1027
        %v1052 = vadd.f32 %v1004, %v1028
        %v1053 = vadd.f32 %v1005, %v1029
        %v1054 = vadd.f32 %v1006, %v1030
        %v1055 = vadd.f32 %v1007, %v1031
        %v1056 = vadd.f32 %v1008, %v1032
        %v1057 = vadd.f32 %v1009, %v1033
        %v1058 = vadd.f32 %v1010, %v1034
        %v1059 = vadd.f32 %v1011, %v1035
        %v1060 = vadd.f32 %v1012, %v1036
        %v1061 = vadd.f32 %v1013, %v1037
        %v1062 = vadd.f32 %v1014, %v1038
        %v1063 = vadd.f32 %v1015, %v1039
        %v1064 = vadd.f32 %v1016, %v1040
        %v1065 = vmul.f32 %v1041, %v969
        %v1066 = vmul.f32 %v1042, %v970
        %v1067 = vmul.f32 %v1043, %v971
        %v1068 = vmul.f32 %v1044, %v972
        %v1069 = vmul.f32 %v1045, %v973
        %v1070 = vmul.f32 %v1046, %v974
        %v1071 = vmul.f32 %v1047, %v975
        %v1072 = vmul.f32 %v1048, %v976
        %v1073 = vmul.f32 %v1049, %v977
        %v1074 = vmul.f32 %v1050, %v978
        %v1075 = vmul.f32 %v1051, %v979
        %v1076 = vmul.f32 %v1052, %v980
        %v1077 = vmul.f32 %v1053, %v981
        %v1078 = vmul.f32 %v1054, %v982
        %v1079 = vmul.f32 %v1055, %v983
        %v1080 = vmul.f32 %v1056, %v984
        %v1081 = vmul.f32 %v1057, %v985
        %v1082 = vmul.f32 %v1058, %v986
        %v1083 = vmul.f32 %v1059, %v987
        %v1084 = vmul.f32 %v1060, %v988
        %v1085 = vmul.f32 %v1061, %v989
        %v1086 = vmul.f32 %v1062, %v990
        %v1087 = vmul.f32 %v1063, %v991
        %v1088 = vmul.f32 %v1064, %v992
        %v1089 = vmul.f32 %v773, 500.0
        %v1090 = vmul.f32 %v774, 500.0
        %v1091 = vmul.f32 %v775, 500.0
        %v1092 = vmul.f32 %v776, 500.0
        %v1093 = vmul.f32 %v777, 500.0
        %v1094 = vmul.f32 %v778, 500.0
        %v1095 = vmul.f32 %v779, 500.0
        %v1096 = vmul.f32 %v780, 500.0
        %v1097 = vmul.f32 %v781, 500.0
        %v1098 = vmul.f32 %v782, 500.0
        %v1099 = vmul.f32 %v783, 500.0
        %v1100 = vmul.f32 %v784, 500.0
        %v1101 = vmul.f32 %v785, 500.0
        %v1102 = vmul.f32 %v786, 500.0
        %v1103 = vmul.f32 %v787, 500.0
        %v1104 = vmul.f32 %v788, 500.0
        %v1105 = vmul.f32 %v789, 500.0
        %v1106 = vmul.f32 %v790, 500.0
        %v1107 = vmul.f32 %v791, 500.0
        %v1108 = vmul.f32 %v792, 500.0
        %v1109 = vmul.f32 %v793, 500.0
        %v1110 = vmul.f32 %v794, 500.0
        %v1111 = vmul.f32 %v795, 500.0
        %v1112 = vmul.f32 %v796, 500.0
        %v1113 = vadd.f32 %v1089, %v1017
        %v1114 = vadd.f32 %v1090, %v1018
        %v1115 = vadd.f32 %v1091, %v1019
        %v1116 = vadd.f32 %v1092, %v1020
        %v1117 = vadd.f32 %v1093, %v1021
        %v1118 = vadd.f32 %v1094, %v1022
        %v1119 = vadd.f32 %v1095, %v1023
        %v1120 = vadd.f32 %v1096, %v1024
        %v1121 = vadd.f32 %v1097, %v1025
        %v1122 = vadd.f32 %v1098, %v1026
        %v1123 = vadd.f32 %v1099, %v1027
        %v1124 = vadd.f32 %v1100, %v1028
        %v1125 = vadd.f32 %v1101, %v1029
        %v1126 = vadd.f32 %v1102, %v1030
        %v1127 = vadd.f32 %v1103, %v1031
        %v1128 = vadd.f32 %v1104, %v1032
        %v1129 = vadd.f32 %v1105, %v1033
        %v1130 = vadd.f32 %v1106, %v1034
        %v1131 = vadd.f32 %v1107, %v1035
        %v1132 = vadd.f32 %v1108, %v1036
        %v1133 = vadd.f32 %v1109, %v1037
        %v1134 = vadd.f32 %v1110, %v1038
        %v1135 = vadd.f32 %v1111, %v1039
        %v1136 = vadd.f32 %v1112, %v1040
        %v1137 = vmul.f32 %v1113, %v969
        %v1138 = vmul.f32 %v1114, %v970
        %v1139 = vmul.f32 %v1115, %v971
        %v1140 = vmul.f32 %v1116, %v972
        %v1141 = vmul.f32 %v1117, %v973
        %v1142 = vmul.f32 %v1118, %v974
        %v1143 = vmul.f32 %v1119, %v975
        %v1144 = vmul.f32 %v1120, %v976
        %v1145 = vmul.f32 %v1121, %v977
        %v1146 = vmul.f32 %v1122, %v978
        %v1147 = vmul.f32 %v1123, %v979
        %v1148 = vmul.f32 %v1124, %v980
        %v1149 = vmul.f32 %v1125, %v981
        %v1150 = vmul.f32 %v1126, %v982
        %v1151 = vmul.f32 %v1127, %v983
        %v1152 = vmul.f32 %v1128, %v984
        %v1153 = vmul.f32 %v1129, %v985
        %v1154 = vmul.f32 %v1130, %v986
        %v1155 = vmul.f32 %v1131, %v987
        %v1156 = vmul.f32 %v1132, %v988
        %v1157 = vmul.f32 %v1133, %v989
        %v1158 = vmul.f32 %v1134, %v990
        %v1159 = vmul.f32 %v1135, %v991
        %v1160 = vmul.f32 %v1136, %v992
        %v1161 = vsub.f32 %v572, %v1065
        %v1162 = vsub.f32 %v573, %v1066
        %v1163 = vsub.f32 %v574, %v1067
        %v1164 = vsub.f32 %v575, %v1068
        %v1165 = vsub.f32 %v576, %v1069
        %v1166 = vsub.f32 %v577, %v1070
        %v1167 = vsub.f32 %v578, %v1071
        %v1168 = vsub.f32 %v579, %v1072
        %v1169 = vsub.f32 %v580, %v1073
        %v1170 = vsub.f32 %v581, %v1074
        %v1171 = vsub.f32 %v582, %v1075
        %v1172 = vsub.f32 %v583, %v1076
        %v1173 = vsub.f32 %v584, %v1077
        %v1174 = vsub.f32 %v585, %v1078
        %v1175 = vsub.f32 %v586, %v1079
        %v1176 = vsub.f32 %v587, %v1080
        %v1177 = vsub.f32 %v588, %v1081
        %v1178 = vsub.f32 %v589, %v1082
        %v1179 = vsub.f32 %v590, %v1083
        %v1180 = vsub.f32 %v591, %v1084
        %v1181 = vsub.f32 %v592, %v1085
        %v1182 = vsub.f32 %v593, %v1086
        %v1183 = vsub.f32 %v594, %v1087
        %v1184 = vsub.f32 %v595, %v1088
        %v1185 = vsub.f32 %v597, %v1137
        %v1186 = vsub.f32 %v598, %v1138
        %v1187 = vsub.f32 %v599, %v1139
        %v1188 = vsub.f32 %v600, %v1140
        %v1189 = vsub.f32 %v601, %v1141
        %v1190 = vsub.f32 %v602, %v1142
        %v1191 = vsub.f32 %v603, %v1143
        %v1192 = vsub.f32 %v604, %v1144
        %v1193 = vsub.f32 %v605, %v1145
        %v1194 = vsub.f32 %v606, %v1146
        %v1195 = vsub.f32 %v607, %v1147
        %v1196 = vsub.f32 %v608, %v1148
        %v1197 = vsub.f32 %v609, %v1149
        %v1198 = vsub.f32 %v610, %v1150
        %v1199 = vsub.f32 %v611, %v1151
        %v1200 = vsub.f32 %v612, %v1152
        %v1201 = vsub.f32 %v613, %v1153
        %v1202 = vsub.f32 %v614, %v1154
        %v1203 = vsub.f32 %v615, %v1155
        %v1204 = vsub.f32 %v616, %v1156
        %v1205 = vsub.f32 %v617, %v1157
        %v1206 = vsub.f32 %v618, %v1158
        %v1207 = vsub.f32 %v619, %v1159
        %v1208 = vsub.f32 %v620, %v1160
        %v1209 = vsel %vm921, %v1161, 0.0
        %v1210 = vsel %vm922, %v1162, 0.0
        %v1211 = vsel %vm923, %v1163, 0.0
        %v1212 = vsel %vm924, %v1164, 0.0
        %v1213 = vsel %vm925, %v1165, 0.0
        %v1214 = vsel %vm926, %v1166, 0.0
        %v1215 = vsel %vm927, %v1167, 0.0
        %v1216 = vsel %vm928, %v1168, 0.0
        %v1217 = vsel %vm929, %v1169, 0.0
        %v1218 = vsel %vm930, %v1170, 0.0
        %v1219 = vsel %vm931, %v1171, 0.0
        %v1220 = vsel %vm932, %v1172, 0.0
        %v1221 = vsel %vm933, %v1173, 0.0
        %v1222 = vsel %vm934, %v1174, 0.0
        %v1223 = vsel %vm935, %v1175, 0.0
        %v1224 = vsel %vm936, %v1176, 0.0
        %v1225 = vsel %vm937, %v1177, 0.0
        %v1226 = vsel %vm938, %v1178, 0.0
        %v1227 = vsel %vm939, %v1179, 0.0
        %v1228 = vsel %vm940, %v1180, 0.0
        %v1229 = vsel %vm941, %v1181, 0.0
        %v1230 = vsel %vm942, %v1182, 0.0
        %v1231 = vsel %vm943, %v1183, 0.0
        %v1232 = vsel %vm944, %v1184, 0.0
        %v1233 = vsel %vm921, %v1185, 0.0
        %v1234 = vsel %vm922, %v1186, 0.0
        %v1235 = vsel %vm923, %v1187, 0.0
        %v1236 = vsel %vm924, %v1188, 0.0
        %v1237 = vsel %vm925, %v1189, 0.0
        %v1238 = vsel %vm926, %v1190, 0.0
        %v1239 = vsel %vm927, %v1191, 0.0
        %v1240 = vsel %vm928, %v1192, 0.0
        %v1241 = vsel %vm929, %v1193, 0.0
        %v1242 = vsel %vm930, %v1194, 0.0
        %v1243 = vsel %vm931, %v1195, 0.0
        %v1244 = vsel %vm932, %v1196, 0.0
        %v1245 = vsel %vm933, %v1197, 0.0
        %v1246 = vsel %vm934, %v1198, 0.0
        %v1247 = vsel %vm935, %v1199, 0.0
        %v1248 = vsel %vm936, %v1200, 0.0
        %v1249 = vsel %vm937, %v1201, 0.0
        %v1250 = vsel %vm938, %v1202, 0.0
        %v1251 = vsel %vm939, %v1203, 0.0
        %v1252 = vsel %vm940, %v1204, 0.0
        %v1253 = vsel %vm941, %v1205, 0.0
        %v1254 = vsel %vm942, %v1206, 0.0
        %v1255 = vsel %vm943, %v1207, 0.0
        %v1256 = vsel %vm944, %v1208, 0.0
        %v1257 = vld [vmem:[%s457] sm:$0xff]
        %v1258 = vmul.f32 %v1209, %v1209
        %v1259 = vmul.f32 %v1210, %v1210
        %v1260 = vmul.f32 %v1211, %v1211
        %v1261 = vmul.f32 %v1212, %v1212
        %v1262 = vmul.f32 %v1213, %v1213
        %v1263 = vmul.f32 %v1214, %v1214
        %v1264 = vmul.f32 %v1215, %v1215
        %v1265 = vmul.f32 %v1216, %v1216
        %v1266 = vmul.f32 %v1217, %v1217
        %v1267 = vmul.f32 %v1218, %v1218
        %v1268 = vmul.f32 %v1219, %v1219
        %v1269 = vmul.f32 %v1220, %v1220
        %v1270 = vmul.f32 %v1221, %v1221
        %v1271 = vmul.f32 %v1222, %v1222
        %v1272 = vmul.f32 %v1223, %v1223
        %v1273 = vmul.f32 %v1224, %v1224
        %v1274 = vmul.f32 %v1225, %v1225
        %v1275 = vmul.f32 %v1226, %v1226
        %v1276 = vmul.f32 %v1227, %v1227
        %v1277 = vmul.f32 %v1228, %v1228
        %v1278 = vmul.f32 %v1229, %v1229
        %v1279 = vmul.f32 %v1230, %v1230
        %v1280 = vmul.f32 %v1231, %v1231
        %v1281 = vmul.f32 %v1232, %v1232
        %v1282 = vmul.f32 %v1233, %v1233
        %v1283 = vmul.f32 %v1234, %v1234
        %v1284 = vmul.f32 %v1235, %v1235
        %v1285 = vmul.f32 %v1236, %v1236
        %v1286 = vmul.f32 %v1237, %v1237
        %v1287 = vmul.f32 %v1238, %v1238
        %v1288 = vmul.f32 %v1239, %v1239
        %v1289 = vmul.f32 %v1240, %v1240
        %v1290 = vmul.f32 %v1241, %v1241
        %v1291 = vmul.f32 %v1242, %v1242
        %v1292 = vmul.f32 %v1243, %v1243
        %v1293 = vmul.f32 %v1244, %v1244
        %v1294 = vmul.f32 %v1245, %v1245
        %v1295 = vmul.f32 %v1246, %v1246
        %v1296 = vmul.f32 %v1247, %v1247
        %v1297 = vmul.f32 %v1248, %v1248
        %v1298 = vmul.f32 %v1249, %v1249
        %v1299 = vmul.f32 %v1250, %v1250
        %v1300 = vmul.f32 %v1251, %v1251
        %v1301 = vmul.f32 %v1252, %v1252
        %v1302 = vmul.f32 %v1253, %v1253
        %v1303 = vmul.f32 %v1254, %v1254
        %v1304 = vmul.f32 %v1255, %v1255
        %v1305 = vmul.f32 %v1256, %v1256
        %v1306 = vadd.f32 %v1258, %v1282
        %v1307 = vadd.f32 %v1259, %v1283
        %v1308 = vadd.f32 %v1260, %v1284
        %v1309 = vadd.f32 %v1261, %v1285
        %v1310 = vadd.f32 %v1262, %v1286
        %v1311 = vadd.f32 %v1263, %v1287
        %v1312 = vadd.f32 %v1264, %v1288
        %v1313 = vadd.f32 %v1265, %v1289
        %v1314 = vadd.f32 %v1266, %v1290
        %v1315 = vadd.f32 %v1267, %v1291
        %v1316 = vadd.f32 %v1268, %v1292
        %v1317 = vadd.f32 %v1269, %v1293
        %v1318 = vadd.f32 %v1270, %v1294
        %v1319 = vadd.f32 %v1271, %v1295
        %v1320 = vadd.f32 %v1272, %v1296
        %v1321 = vadd.f32 %v1273, %v1297
        %v1322 = vadd.f32 %v1274, %v1298
        %v1323 = vadd.f32 %v1275, %v1299
        %v1324 = vadd.f32 %v1276, %v1300
        %v1325 = vadd.f32 %v1277, %v1301
        %v1326 = vadd.f32 %v1278, %v1302
        %v1327 = vadd.f32 %v1279, %v1303
        %v1328 = vadd.f32 %v1280, %v1304
        %v1329 = vadd.f32 %v1281, %v1305
        %v1330 = vadd.f32 %v1306, %v1307
        %v1331 = vadd.f32 %v1330, %v1308
        %v1332 = vadd.f32 %v1331, %v1309
        %v1333 = vadd.f32 %v1332, %v1310
        %v1334 = vadd.f32 %v1333, %v1311
        %v1335 = vadd.f32 %v1334, %v1312
        %v1336 = vadd.f32 %v1335, %v1313
        %v1337 = vadd.f32 %v1336, %v1314
        %v1338 = vadd.f32 %v1337, %v1315
        %v1339 = vadd.f32 %v1338, %v1316
        %v1340 = vadd.f32 %v1339, %v1317
        %v1341 = vadd.f32 %v1340, %v1318
        %v1342 = vadd.f32 %v1341, %v1319
        %v1343 = vadd.f32 %v1342, %v1320
        %v1344 = vadd.f32 %v1343, %v1321
        %v1345 = vadd.f32 %v1344, %v1322
        %v1346 = vadd.f32 %v1345, %v1323
        %v1347 = vadd.f32 %v1346, %v1324
        %v1348 = vadd.f32 %v1347, %v1325
        %v1349 = vadd.f32 %v1348, %v1326
        %v1350 = vadd.f32 %v1349, %v1327
        %v1351 = vadd.f32 %v1350, %v1328
        %v1352 = vadd.f32 %v1351, %v1329
        %1353 = vadd.xlane.f32.xlu0 %v1352
        %v1354 = vpop.xlane.xlu0 %1353
        %v1355 = vrot.slane %v1354, 4
        %v1356 = vadd.f32 %v1354, %v1355
        %v1357 = vrot.slane %v1356, 2
        %v1358 = vadd.f32 %v1356, %v1357
        %v1359 = vrot.slane %v1358, 1
        %v1360 = vadd.f32 %v1358, %v1359
        %s1361 = vtos %v1360
        %v1362 = vstv %s1361
        %v1363 = vadd.f32 %v1257, %v1362
        %1364 = vst [vmem:[%s457] sm:$0xff] %v1363
        %s1365 = sand.u32 %s133, 1
        %s1366 = scalar_lea.sflag [#allocation4], %s1365
        %s1367 = sand.u32 %s133, 1
        %s1368 = smul.addr %s1367, 8
        %s1369 = scalar_lea.vmem [#allocation8], %s1368
        // Predicated region
        $region83: #{tpu_custom_call.1} parent=65 // pred_check
          %p1370 = pneg %p143
        $region84: #{tpu_custom_call.1} parent=65 // pred_check_branch
          %1372 = sbr.rel (%p1370) target = $region86
        $region85: #{tpu_custom_call.1} parent=65 // pred_region
          %s1374 = ssub.s32 128, 128
          %1375 = vsyncadd %s1366, %s1374
          %s1376 = smul.addr %s27, 128
          %s1377 = scalar_lea.hbm %s3, %s1376
          %s1379 = sshll.u32 %s1369, 4
          %s1380 = int_to_ptr.vmem [resolvable:$true] %s1379
          %1382 = dma.vmem_to_hbm [thread:$0]  %s1380, 128, %s1377, %s1366
        $region86: #{tpu_custom_call.1} parent=65 // pred_fallthru
          _
      $region66: #{tpu_custom_call.1} parent=5 // pred_fallthru
        _
      %p1383 = scmp.le.s32.totalorder 2, %s18
      // Predicated region
      $region87: #{tpu_custom_call.1} parent=5 // pred_check
        %p1384 = pneg %p1383
      $region88: #{tpu_custom_call.1} parent=5 // pred_check_branch
        %1386 = sbr.rel (%p1384) target = $region90
      $region89: #{tpu_custom_call.1} parent=5 // pred_region
        %s1387 = ssub.s32 %s18, 2
        // Predicated region
        $region91: #{tpu_custom_call.1} parent=89 // pred_check
          %p1388 = pneg %p149
        $region92: #{tpu_custom_call.1} parent=89 // pred_check_branch
          %1390 = sbr.rel (%p1388) target = $region94
        $region93: #{tpu_custom_call.1} parent=89 // pred_region
          %s1391 = sand.u32 %s134, 1
          %s1392 = scalar_lea.sflag [#allocation4], %s1391
          %s1393 = sand.u32 %s134, 1
          %s1394 = smul.addr %s1393, 8
          %s1395 = scalar_lea.vmem [#allocation8], %s1394
          %1396 = dma.done %s1392, 128
        $region94: #{tpu_custom_call.1} parent=89 // pred_fallthru
          _
      $region90: #{tpu_custom_call.1} parent=5 // pred_fallthru
        _
    $region6: #{tpu_custom_call.1} parent=1 // loop_footer
      %s22 = sadd.s32 1, %s18
    $region7: #{tpu_custom_call.1} parent=1 // loop_footer_branch
      %17 = sbr.rel target = $region3
    $region8: #{tpu_custom_call.1} parent=1 // loop_exit
      _
    %1397 = vsyncpa [#allocation3], 1
    %s1398 = scalar_lea.sflag [#allocation3], 1
    %1399 = vsyncpa %s1398, 1
    %1400 = vsyncpa [#allocation7], 1
    %s1401 = scalar_lea.sflag [#allocation7], 1
    %1402 = vsyncpa %s1401, 1
    %1403 = vsyncpa [#allocation4], 1
    %s1404 = scalar_lea.sflag [#allocation4], 1
    %1405 = vsyncpa %s1404, 1

</llo_original>
